<compile_context>
chip_gen: v6e
topology: v6e:2x2x1
jax: 0.10.0
libtpu: 0.0.40
codegen_flags: <defaults>
</compile_context>

<pallas_src>
import functools

import jax
import jax.numpy as jnp
from jax.experimental import pallas as pl
from jax.experimental.pallas import tpu as pltpu

_LANES = 128


def _round_up(v, m):
    return ((v + m - 1) // m) * m


def _pick_btile(batch, max_tile=8):
    """Largest divisor of `batch` <= max_tile that still leaves >= 2 grid steps
    (keeps both TensorCores busy on v7x)."""
    best = 1
    for t in range(1, min(batch, max_tile) + 1):
        if batch % t == 0 and batch // t >= 2:
            best = t
    return best


# ---------------------------------------------------------------------------
# Fused kernel: edge hops + global hops + decoder for one batch tile.
# ---------------------------------------------------------------------------

def _make_fused_kernel(n_edge, n_global, k, anum, n_nodes, b_tile):
    m_rows = b_tile * n_nodes          # batch folded into the matmul M dimension

    def kernel(*refs):
        nn_ref, x_ref = refs[0], refs[1]
        pos = 2
        edge_w = [(refs[pos + 3 * i], refs[pos + 3 * i + 1], refs[pos + 3 * i + 2])
                  for i in range(n_edge)]
        pos += 3 * n_edge
        glob_w = [(refs[pos + 3 * i], refs[pos + 3 * i + 1], refs[pos + 3 * i + 2])
                  for i in range(n_global)]
        pos += 3 * n_global
        wd_ref, bd_ref = refs[pos], refs[pos + 1]
        out_ref = refs[pos + 2]

        # (b_tile, N, C) -> (b_tile*N, C): batch folded into rows.
        x = x_ref[...].reshape(m_rows, x_ref.shape[-1]).astype(jnp.float32)

        # Stacked neighbor one-hot, built ONCE (depends only on nn_idx, which
        # is constant across hops).  The wrapper pre-orders rows j-major /
        # node-minor (r = j*m_rows + node) and pre-offsets indices into the
        # folded node axis, so the gather result reshapes tile-aligned.
        nnv = nn_ref[...].reshape(k * m_rows, 1)                         # int32
        col = jax.lax.broadcasted_iota(jnp.int32, (k * m_rows, m_rows), 1)
        onehot = (nnv == col).astype(jnp.bfloat16)                       # exact 0/1

        # ---- common_hop edge convolutions (reassociated DGCNN edge conv) ----
        #   max_j relu((x_j - x_i)@W1 + x_i@W2 + b)
        # = max_j relu(x_j@W1 + x_i@(W2 - W1) + b)
        # Two small dense matmuls per hop + ONE fused (k*M, M)@(M, Cout)
        # one-hot gather matmul covering all k neighbors.
        # TODO(synk): switch to a row/DMA gather for N >~ 128-256.
        for wn_ref, wc_ref, b_ref in edge_w:
            cout = wn_ref.shape[1]
            xb = x.astype(jnp.bfloat16)
            a = jnp.dot(xb, wn_ref[...],
                        preferred_element_type=jnp.float32)              # x @ W1
            c = jnp.dot(xb, wc_ref[...],
                        preferred_element_type=jnp.float32) + b_ref[...]  # x@(W2-W1)+b
            gath = jnp.dot(onehot, a.astype(jnp.bfloat16),
                           preferred_element_type=jnp.float32)           # (k*M, Cout)
            gath = gath.reshape(k, m_rows, cout)
            # relu then tree max over the k neighbor slices (pure VPU).
            x = jnp.max(jnp.maximum(gath + c[None, :, :], 0.0), axis=0)  # (M, Cout)

        # ---- global_hop global-context convolutions -------------------------
        for wl_ref, wg_ref, b_ref in glob_w:
            hdim = wl_ref.shape[1]
            g = jnp.max(x.reshape(b_tile, n_nodes, hdim), axis=1)        # per-batch pool
            h_loc = jnp.dot(x.astype(jnp.bfloat16), wl_ref[...],
                            preferred_element_type=jnp.float32)          # (M, H)
            h_glb = jnp.dot(g.astype(jnp.bfloat16), wg_ref[...],
                            preferred_element_type=jnp.float32)          # (b_tile, H)
            h3 = h_loc.reshape(b_tile, n_nodes, hdim) + h_glb[:, None, :] + b_ref[...]
            x = jnp.maximum(h3, 0.0).reshape(m_rows, hdim)

        # ---- attention decoding: per-agent score -> 10*tanh -> softmax ------
        s = jnp.dot(x.astype(jnp.bfloat16), wd_ref[...],
                    preferred_element_type=jnp.float32) + bd_ref[...]    # (M, AP)
        s = 10.0 * jnp.tanh(s)
        lane = jax.lax.broadcasted_iota(jnp.int32, s.shape, 1)
        s = jnp.where(lane < anum, s, -1e30)          # mask padded agent lanes
        s = s - jnp.max(s, axis=-1, keepdims=True)
        e = jnp.exp(s)
        probs = e / jnp.sum(e, axis=-1, keepdims=True)   # exact normalization
        out_ref[...] = probs.reshape(b_tile, n_nodes, probs.shape[-1])

    return kernel


# ---------------------------------------------------------------------------
# Parameter construction (deterministic, synthetic)
# ---------------------------------------------------------------------------

def init_mtsp_params(key, c_in, hidden_size, anum, common_hop, global_hop, etypes=1):
    # TODO(synk): `etypes` (per-edge-type conv banks inside graph_embedding) is
    # not reconstructable from the given forward; a single edge type is used.
    del etypes
    keys = jax.random.split(key, common_hop + global_hop + 1)
    params = {"edge": [], "global": []}

    cin = c_in
    for hop in range(common_hop):
        cout = hidden_size[min(hop, len(hidden_size) - 1)]
        w_full = jax.random.normal(keys[hop], (2 * cin, cout), jnp.float32) * (
            2.0 / (2 * cin)) ** 0.5
        w1, w2 = w_full[:cin], w_full[cin:]
        # Reassociated edge conv: store W1 (neighbor) and W2-W1 (center).
        # Weights in bf16 (matmul operands only); biases stay f32.
        params["edge"].append((w1.astype(jnp.bfloat16),
                               (w2 - w1).astype(jnp.bfloat16),
                               jnp.zeros((1, cout), jnp.float32)))
        cin = cout

    h = cin                                            # width entering global hops
    for hop in range(global_hop):
        w_full = jax.random.normal(keys[common_hop + hop], (2 * h, h),
                                   jnp.float32) * (2.0 / (2 * h)) ** 0.5
        params["global"].append((w_full[:h].astype(jnp.bfloat16),     # local half
                                 w_full[h:].astype(jnp.bfloat16),     # global-pool half
                                 jnp.zeros((1, h), jnp.float32)))

    # Decoder output stays lane-padded to 128 so the HBM store is lane-dense;
    # padded agent lanes are masked in-kernel and sliced off outside.
    ap = _round_up(anum, _LANES)
    wd = jax.random.normal(keys[-1], (h, anum), jnp.float32) * (1.0 / h) ** 0.5
    params["dec_w"] = (jnp.zeros((h, ap), jnp.float32)
                       .at[:, :anum].set(wd).astype(jnp.bfloat16))
    params["dec_b"] = jnp.zeros((1, ap), jnp.float32)
    return params


# ---------------------------------------------------------------------------
# Forward pass
# ---------------------------------------------------------------------------

@functools.partial(jax.jit, static_argnames=("anum", "maxsample", "instance_num"))
def mtsp_forward(params, nfeature, nn_idx, anum, maxsample=True, instance_num=1,
                 sample_key=None):
    """nfeature: (B, C, 1, N) NCHW; nn_idx: (B, N, k) int32.

    Returns (probs, samples) matching the PyTorch module:
      probs:   (B, N, anum)          softmax-over-agent probabilities
      samples: (B, instance_num, N)  agent assignments per node
    """
    B, C, _, N = nfeature.shape
    x = jnp.transpose(nfeature[:, :, 0, :], (0, 2, 1)).astype(jnp.float32)  # (B, N, C)
    nn_idx = nn_idx.astype(jnp.int32)
    K = nn_idx.shape[2]

    edge, glob = params["edge"], params["global"]
    wd, bd = params["dec_w"], params["dec_b"]
    n_edge, n_global = len(edge), len(glob)
    AP = wd.shape[1]

    # ---- batch folding: B_TILE batch elements per grid step ----------------
    b_tile = _pick_btile(B)
    grid_n = B // b_tile
    m_rows = b_tile * N

    # Neighbor indices, pre-arranged in plain XLA (outside the kernel) so the
    # in-kernel stacked one-hot rows are j-major / node-minor within a tile
    # (r = j*m_rows + b_local*N + i) and already offset into the folded node
    # axis.  This keeps every in-kernel reshape tile-aligned.
    local_b = (jnp.arange(B) % b_tile)[:, None, None]
    nn_t = jnp.transpose(nn_idx, (0, 2, 1)) + local_b * N          # (B, K, N)
    nn_t = nn_t.reshape(grid_n, b_tile, K, N)
    nn_t = jnp.transpose(nn_t, (0, 2, 1, 3)).reshape(grid_n, K * m_rows, 1)

    # The reference's nfeature.repeat(1, anum, 1, 1, 1) produces anum identical
    # copies; the decoder consumes the un-repeated embedding with per-agent
    # weights, which is numerically equivalent (no materialized repeat).
    kernel = _make_fused_kernel(n_edge, n_global, K, anum, N, b_tile)

    operands = [nn_t, x]
    in_specs = [
        pl.BlockSpec((1, K * m_rows, 1), lambda g: (g, 0, 0)),
        pl.BlockSpec((b_tile, N, C), lambda g: (g, 0, 0)),
    ]
    for group in list(edge) + list(glob) + [(wd, bd)]:
        for t in group:
            operands.append(t)
            # constant index_map -> weights DMA'd once, resident across grid.
            # TODO(synk): pipeline_mode=pl.Buffered(1) would halve their VMEM
            # footprint (v7x headroom); left at the default for safety.
            in_specs.append(pl.BlockSpec(t.shape, lambda g: (0, 0)))

    # Rough cost hint so XLA schedules the fused custom call sensibly.
    flops = 0
    cin = C
    for wn, _, _ in edge:
        cout = int(wn.shape[1])
        flops += 2 * 2 * B * N * cin * cout                 # two dense matmuls
        flops += 2 * B * K * N * m_rows * cout              # fused one-hot gather
        cin = cout
    for wl, wg, _ in glob:
        flops += 2 * B * N * int(wl.shape[0]) * int(wl.shape[1])
        flops += 2 * B * int(wg.shape[0]) * int(wg.shape[1])
    flops += 2 * B * N * int(wd.shape[0]) * AP
    transc = 2 * B * N * AP
    bytes_accessed = (sum(int(o.size) * o.dtype.itemsize for o in operands)
                      + B * N * AP * 4)

    probs_pad = pl.pallas_call(
        kernel,
        grid=(grid_n,),
        in_specs=in_specs,
        out_specs=pl.BlockSpec((b_tile, N, AP), lambda g: (g, 0, 0)),
        out_shape=jax.ShapeDtypeStruct((B, N, AP), jnp.float32),
        compiler_params=pltpu.CompilerParams(
            dimension_semantics=("parallel",),       # batch-tile axis across TCs (v7x)
            vmem_limit_bytes=32 * 1024 * 1024,       # fits v5e/v6e/v7x scoped VMEM
        ),
        cost_estimate=pl.CostEstimate(
            flops=int(flops),
            transcendentals=int(transc),
            bytes_accessed=int(bytes_accessed)),
    )(*operands)

    probs = probs_pad[:, :, :anum]                   # drop padded agent lanes

    # ---- sampling (glue, matches torch.argmax / multinomial) ---------------
    if maxsample:
        samples = jnp.argmax(probs, axis=2)[:, None, :]           # (B, 1, N)
    else:
        keys = jax.random.split(sample_key, instance_num)
        draws = [jax.random.categorical(kk, jnp.log(probs + 1e-20), axis=2)
                 for kk in keys]
        samples = jnp.stack(draws, axis=1)                        # (B, inst, N)

    return probs, samples


# ---------------------------------------------------------------------------
# Main
# ---------------------------------------------------------------------------

if __name__ == "__main__":
    B, C_IN, N, K = 2, 4, 16, 4
    HIDDEN_SIZE = [16, 32]
    ANUM = 3
    COMMON_HOP = 2
    GLOBAL_HOP = 1
    ETYPES = 1

    key = jax.random.PRNGKey(0)
    k_feat, k_idx = jax.random.split(key)
    nfeature = jax.random.normal(k_feat, (B, C_IN, 1, N), jnp.float32)
    nn_idx = jax.random.randint(k_idx, (B, N, K), 0, N, jnp.int32)

    params = init_mtsp_params(
        jax.random.PRNGKey(42), C_IN, HIDDEN_SIZE, ANUM, COMMON_HOP, GLOBAL_HOP, ETYPES)

    probs, samples = mtsp_forward(params, nfeature, nn_idx, anum=ANUM, maxsample=True)
    probs = jax.block_until_ready(probs)
    samples = jax.block_until_ready(samples)

    assert probs.shape == (B, N, ANUM)
    assert samples.shape == (B, 1, N)
    assert bool(jnp.all(jnp.isfinite(probs)))
    # rows of probs must be valid distributions over agents (exact softmax divide)
    assert bool(jnp.allclose(jnp.sum(probs, axis=-1), 1.0, atol=1e-3))

    print("KERNEL_OK")
</pallas_src>

<mosaic_0001>
module attributes {stable_mosaic.version = 11 : i64} {
  func.func @kernel(%arg0: i32, %arg1: memref<1x64x1xi32, #tpu.memory_space<vmem>>, %arg2: memref<1x16x4xf32, #tpu.memory_space<vmem>>, %arg3: memref<4x16xbf16, #tpu.memory_space<vmem>>, %arg4: memref<4x16xbf16, #tpu.memory_space<vmem>>, %arg5: memref<1x16xf32, #tpu.memory_space<vmem>>, %arg6: memref<16x32xbf16, #tpu.memory_space<vmem>>, %arg7: memref<16x32xbf16, #tpu.memory_space<vmem>>, %arg8: memref<1x32xf32, #tpu.memory_space<vmem>>, %arg9: memref<32x32xbf16, #tpu.memory_space<vmem>>, %arg10: memref<32x32xbf16, #tpu.memory_space<vmem>>, %arg11: memref<1x32xf32, #tpu.memory_space<vmem>>, %arg12: memref<32x128xbf16, #tpu.memory_space<vmem>>, %arg13: memref<1x128xf32, #tpu.memory_space<vmem>>, %arg14: memref<1x16x128xf32, #tpu.memory_space<vmem>>) attributes {dimension_semantics = [#tpu.dimension_semantics<parallel>], iteration_bounds = array<i64: 2>, scalar_prefetch = 0 : i64, scratch_operands = 0 : i64, tpu.core_type = #tpu.core_type<tc>, window_params = [{transform_indices = @transform_0, window_bounds = array<i64: 1, 64, 1>}, {transform_indices = @transform_1, window_bounds = array<i64: 1, 16, 4>}, {pipeline_mode = #tpu.pipeline_mode<synchronous>, transform_indices = @transform_2, window_bounds = array<i64: 4, 16>}, {pipeline_mode = #tpu.pipeline_mode<synchronous>, transform_indices = @transform_3, window_bounds = array<i64: 4, 16>}, {pipeline_mode = #tpu.pipeline_mode<synchronous>, transform_indices = @transform_4, window_bounds = array<i64: 1, 16>}, {pipeline_mode = #tpu.pipeline_mode<synchronous>, transform_indices = @transform_5, window_bounds = array<i64: 16, 32>}, {pipeline_mode = #tpu.pipeline_mode<synchronous>, transform_indices = @transform_6, window_bounds = array<i64: 16, 32>}, {pipeline_mode = #tpu.pipeline_mode<synchronous>, transform_indices = @transform_7, window_bounds = array<i64: 1, 32>}, {pipeline_mode = #tpu.pipeline_mode<synchronous>, transform_indices = @transform_8, window_bounds = array<i64: 32, 32>}, {pipeline_mode = #tpu.pipeline_mode<synchronous>, transform_indices = @transform_9, window_bounds = array<i64: 32, 32>}, {pipeline_mode = #tpu.pipeline_mode<synchronous>, transform_indices = @transform_10, window_bounds = array<i64: 1, 32>}, {pipeline_mode = #tpu.pipeline_mode<synchronous>, transform_indices = @transform_11, window_bounds = array<i64: 32, 128>}, {pipeline_mode = #tpu.pipeline_mode<synchronous>, transform_indices = @transform_12, window_bounds = array<i64: 1, 128>}, {transform_indices = @transform_13, window_bounds = array<i64: 1, 16, 128>}]} {
    %c0 = arith.constant 0 : index
    %c0_0 = arith.constant 0 : index
    %c0_1 = arith.constant 0 : index
    %0 = vector.load %arg2[%c0, %c0_0, %c0_1] : memref<1x16x4xf32, #tpu.memory_space<vmem>>, vector<1x16x4xf32>
    %1 = vector.shape_cast %0 : vector<1x16x4xf32> to vector<16x4xf32>
    %c0_2 = arith.constant 0 : index
    %c0_3 = arith.constant 0 : index
    %c0_4 = arith.constant 0 : index
    %2 = vector.load %arg1[%c0_2, %c0_3, %c0_4] : memref<1x64x1xi32, #tpu.memory_space<vmem>>, vector<1x64x1xi32>
    %3 = vector.shape_cast %2 : vector<1x64x1xi32> to vector<64x1xi32>
    %4 = tpu.iota {dimensions = array<i32: 1>} : vector<64x16xi32>
    %5 = vector.broadcast %3 : vector<64x1xi32> to vector<64x16xi32>
    %6 = arith.cmpi eq, %5, %4 : vector<64x16xi32>
    %7 = arith.extui %6 : vector<64x16xi1> to vector<64x16xi32>
    %8 = arith.sitofp %7 : vector<64x16xi32> to vector<64x16xf32>
    %9 = arith.truncf %8 : vector<64x16xf32> to vector<64x16xbf16>
    %10 = arith.truncf %1 : vector<16x4xf32> to vector<16x4xbf16>
    %c0_5 = arith.constant 0 : index
    %c0_6 = arith.constant 0 : index
    %11 = vector.load %arg3[%c0_5, %c0_6] : memref<4x16xbf16, #tpu.memory_space<vmem>>, vector<4x16xbf16>
    %cst = arith.constant dense<0.000000e+00> : vector<16x16xf32>
    %12 = tpu.matmul %10, %11, %cst {dimension_numbers = #tpu.dot_dimension_numbers<[1], [0], [0], [1], [0, 0, 1, 1], [], []>} : vector<16x4xbf16>, vector<4x16xbf16>, vector<16x16xf32> -> vector<16x16xf32>
    %c0_7 = arith.constant 0 : index
    %c0_8 = arith.constant 0 : index
    %13 = vector.load %arg4[%c0_7, %c0_8] : memref<4x16xbf16, #tpu.memory_space<vmem>>, vector<4x16xbf16>
    %cst_9 = arith.constant dense<0.000000e+00> : vector<16x16xf32>
    %14 = tpu.matmul %10, %13, %cst_9 {dimension_numbers = #tpu.dot_dimension_numbers<[1], [0], [0], [1], [0, 0, 1, 1], [], []>} : vector<16x4xbf16>, vector<4x16xbf16>, vector<16x16xf32> -> vector<16x16xf32>
    %c0_10 = arith.constant 0 : index
    %c0_11 = arith.constant 0 : index
    %15 = vector.load %arg5[%c0_10, %c0_11] : memref<1x16xf32, #tpu.memory_space<vmem>>, vector<1x16xf32>
    %16 = vector.broadcast %15 : vector<1x16xf32> to vector<16x16xf32>
    %17 = arith.addf %14, %16 : vector<16x16xf32>
    %18 = arith.truncf %12 : vector<16x16xf32> to vector<16x16xbf16>
    %cst_12 = arith.constant dense<0.000000e+00> : vector<64x16xf32>
    %19 = tpu.matmul %9, %18, %cst_12 {dimension_numbers = #tpu.dot_dimension_numbers<[1], [0], [0], [1], [0, 0, 1, 1], [], []>} : vector<64x16xbf16>, vector<16x16xbf16>, vector<64x16xf32> -> vector<64x16xf32>
    %20 = vector.shape_cast %19 : vector<64x16xf32> to vector<4x16x16xf32>
    %21 = vector.shape_cast %17 : vector<16x16xf32> to vector<1x16x16xf32>
    %22 = vector.broadcast %21 : vector<1x16x16xf32> to vector<4x16x16xf32>
    %23 = arith.addf %20, %22 : vector<4x16x16xf32>
    %cst_13 = arith.constant 0.000000e+00 : f32
    %24 = vector.broadcast %cst_13 : f32 to vector<4x16x16xf32>
    %25 = arith.maximumf %23, %24 : vector<4x16x16xf32>
    %cst_14 = arith.constant dense<0xFF800000> : vector<16x16xf32>
    %26 = vector.multi_reduction <maximumf>, %25, %cst_14 [0] : vector<4x16x16xf32> to vector<16x16xf32>
    %27 = arith.truncf %26 : vector<16x16xf32> to vector<16x16xbf16>
    %c0_15 = arith.constant 0 : index
    %c0_16 = arith.constant 0 : index
    %28 = vector.load %arg6[%c0_15, %c0_16] : memref<16x32xbf16, #tpu.memory_space<vmem>>, vector<16x32xbf16>
    %cst_17 = arith.constant dense<0.000000e+00> : vector<16x32xf32>
    %29 = tpu.matmul %27, %28, %cst_17 {dimension_numbers = #tpu.dot_dimension_numbers<[1], [0], [0], [1], [0, 0, 1, 1], [], []>} : vector<16x16xbf16>, vector<16x32xbf16>, vector<16x32xf32> -> vector<16x32xf32>
    %c0_18 = arith.constant 0 : index
    %c0_19 = arith.constant 0 : index
    %30 = vector.load %arg7[%c0_18, %c0_19] : memref<16x32xbf16, #tpu.memory_space<vmem>>, vector<16x32xbf16>
    %cst_20 = arith.constant dense<0.000000e+00> : vector<16x32xf32>
    %31 = tpu.matmul %27, %30, %cst_20 {dimension_numbers = #tpu.dot_dimension_numbers<[1], [0], [0], [1], [0, 0, 1, 1], [], []>} : vector<16x16xbf16>, vector<16x32xbf16>, vector<16x32xf32> -> vector<16x32xf32>
    %c0_21 = arith.constant 0 : index
    %c0_22 = arith.constant 0 : index
    %32 = vector.load %arg8[%c0_21, %c0_22] : memref<1x32xf32, #tpu.memory_space<vmem>>, vector<1x32xf32>
    %33 = vector.broadcast %32 : vector<1x32xf32> to vector<16x32xf32>
    %34 = arith.addf %31, %33 : vector<16x32xf32>
    %35 = arith.truncf %29 : vector<16x32xf32> to vector<16x32xbf16>
    %cst_23 = arith.constant dense<0.000000e+00> : vector<64x32xf32>
    %36 = tpu.matmul %9, %35, %cst_23 {dimension_numbers = #tpu.dot_dimension_numbers<[1], [0], [0], [1], [0, 0, 1, 1], [], []>} : vector<64x16xbf16>, vector<16x32xbf16>, vector<64x32xf32> -> vector<64x32xf32>
    %37 = vector.shape_cast %36 : vector<64x32xf32> to vector<4x16x32xf32>
    %38 = vector.shape_cast %34 : vector<16x32xf32> to vector<1x16x32xf32>
    %39 = vector.broadcast %38 : vector<1x16x32xf32> to vector<4x16x32xf32>
    %40 = arith.addf %37, %39 : vector<4x16x32xf32>
    %cst_24 = arith.constant 0.000000e+00 : f32
    %41 = vector.broadcast %cst_24 : f32 to vector<4x16x32xf32>
    %42 = arith.maximumf %40, %41 : vector<4x16x32xf32>
    %cst_25 = arith.constant dense<0xFF800000> : vector<16x32xf32>
    %43 = vector.multi_reduction <maximumf>, %42, %cst_25 [0] : vector<4x16x32xf32> to vector<16x32xf32>
    %44 = vector.shape_cast %43 : vector<16x32xf32> to vector<1x16x32xf32>
    %cst_26 = arith.constant dense<0xFF800000> : vector<1x32xf32>
    %45 = vector.multi_reduction <maximumf>, %44, %cst_26 [1] : vector<1x16x32xf32> to vector<1x32xf32>
    %46 = arith.truncf %43 : vector<16x32xf32> to vector<16x32xbf16>
    %c0_27 = arith.constant 0 : index
    %c0_28 = arith.constant 0 : index
    %47 = vector.load %arg9[%c0_27, %c0_28] : memref<32x32xbf16, #tpu.memory_space<vmem>>, vector<32x32xbf16>
    %cst_29 = arith.constant dense<0.000000e+00> : vector<16x32xf32>
    %48 = tpu.matmul %46, %47, %cst_29 {dimension_numbers = #tpu.dot_dimension_numbers<[1], [0], [0], [1], [0, 0, 1, 1], [], []>} : vector<16x32xbf16>, vector<32x32xbf16>, vector<16x32xf32> -> vector<16x32xf32>
    %49 = arith.truncf %45 : vector<1x32xf32> to vector<1x32xbf16>
    %c0_30 = arith.constant 0 : index
    %c0_31 = arith.constant 0 : index
    %50 = vector.load %arg10[%c0_30, %c0_31] : memref<32x32xbf16, #tpu.memory_space<vmem>>, vector<32x32xbf16>
    %cst_32 = arith.constant dense<0.000000e+00> : vector<1x32xf32>
    %51 = tpu.matmul %49, %50, %cst_32 {dimension_numbers = #tpu.dot_dimension_numbers<[1], [0], [0], [1], [0, 0, 1, 1], [], []>} : vector<1x32xbf16>, vector<32x32xbf16>, vector<1x32xf32> -> vector<1x32xf32>
    %52 = vector.shape_cast %48 : vector<16x32xf32> to vector<1x16x32xf32>
    %53 = vector.shape_cast %51 : vector<1x32xf32> to vector<1x1x32xf32>
    %54 = vector.broadcast %53 : vector<1x1x32xf32> to vector<1x16x32xf32>
    %55 = arith.addf %52, %54 : vector<1x16x32xf32>
    %c0_33 = arith.constant 0 : index
    %c0_34 = arith.constant 0 : index
    %56 = vector.load %arg11[%c0_33, %c0_34] : memref<1x32xf32, #tpu.memory_space<vmem>>, vector<1x32xf32>
    %57 = vector.shape_cast %56 : vector<1x32xf32> to vector<1x1x32xf32>
    %58 = vector.broadcast %57 : vector<1x1x32xf32> to vector<1x16x32xf32>
    %59 = arith.addf %55, %58 : vector<1x16x32xf32>
    %cst_35 = arith.constant 0.000000e+00 : f32
    %60 = vector.broadcast %cst_35 : f32 to vector<1x16x32xf32>
    %61 = arith.maximumf %59, %60 : vector<1x16x32xf32>
    %62 = vector.shape_cast %61 : vector<1x16x32xf32> to vector<16x32xf32>
    %63 = arith.truncf %62 : vector<16x32xf32> to vector<16x32xbf16>
    %c0_36 = arith.constant 0 : index
    %c0_37 = arith.constant 0 : index
    %64 = vector.load %arg12[%c0_36, %c0_37] : memref<32x128xbf16, #tpu.memory_space<vmem>>, vector<32x128xbf16>
    %cst_38 = arith.constant dense<0.000000e+00> : vector<16x128xf32>
    %65 = tpu.matmul %63, %64, %cst_38 {dimension_numbers = #tpu.dot_dimension_numbers<[1], [0], [0], [1], [0, 0, 1, 1], [], []>} : vector<16x32xbf16>, vector<32x128xbf16>, vector<16x128xf32> -> vector<16x128xf32>
    %c0_39 = arith.constant 0 : index
    %c0_40 = arith.constant 0 : index
    %66 = vector.load %arg13[%c0_39, %c0_40] : memref<1x128xf32, #tpu.memory_space<vmem>>, vector<1x128xf32>
    %67 = vector.broadcast %66 : vector<1x128xf32> to vector<16x128xf32>
    %68 = arith.addf %65, %67 : vector<16x128xf32>
    %69 = math.tanh %68 : vector<16x128xf32>
    %cst_41 = arith.constant 1.000000e+01 : f32
    %70 = vector.broadcast %cst_41 : f32 to vector<16x128xf32>
    %71 = arith.mulf %70, %69 : vector<16x128xf32>
    %72 = tpu.iota {dimensions = array<i32: 1>} : vector<16x128xi32>
    %c3_i32 = arith.constant 3 : i32
    %73 = vector.broadcast %c3_i32 : i32 to vector<16x128xi32>
    %74 = arith.cmpi slt, %72, %73 : vector<16x128xi32>
    %cst_42 = arith.constant -1.000000e+30 : f32
    %75 = vector.broadcast %cst_42 : f32 to vector<16x128xf32>
    %76 = arith.select %74, %71, %75 : vector<16x128xi1>, vector<16x128xf32>
    %cst_43 = arith.constant dense<0xFF800000> : vector<16xf32>
    %77 = vector.multi_reduction <maximumf>, %76, %cst_43 [1] : vector<16x128xf32> to vector<16xf32>
    %78 = vector.shape_cast %77 : vector<16xf32> to vector<16x1xf32>
    %79 = vector.broadcast %78 : vector<16x1xf32> to vector<16x128xf32>
    %80 = arith.subf %76, %79 : vector<16x128xf32>
    %81 = math.exp %80 : vector<16x128xf32>
    %cst_44 = arith.constant dense<0.000000e+00> : vector<16xf32>
    %82 = vector.multi_reduction <add>, %81, %cst_44 [1] : vector<16x128xf32> to vector<16xf32>
    %83 = vector.shape_cast %82 : vector<16xf32> to vector<16x1xf32>
    %84 = vector.broadcast %83 : vector<16x1xf32> to vector<16x128xf32>
    %85 = arith.divf %81, %84 : vector<16x128xf32>
    %86 = vector.shape_cast %85 : vector<16x128xf32> to vector<1x16x128xf32>
    %c0_45 = arith.constant 0 : index
    %c0_46 = arith.constant 0 : index
    %c0_47 = arith.constant 0 : index
    %87 = vector.load %arg14[%c0_45, %c0_46, %c0_47] : memref<1x16x128xf32, #tpu.memory_space<vmem>>, vector<1x16x128xf32>
    tpu.vector_store %arg14[%c0_45, %c0_46, %c0_47], %86 {strides = array<i32>} : memref<1x16x128xf32, #tpu.memory_space<vmem>>, vector<1x16x128xf32>,
    return
  }
  func.func @transform_0(%arg0: i32) -> (i32, i32, i32) {
    %c0_i32 = arith.constant 0 : i32
    %c0_i32_0 = arith.constant 0 : i32
    %c0_i32_1 = arith.constant 0 : i32
    return %arg0, %c0_i32, %c0_i32_0 : i32, i32, i32
  }
  func.func @transform_1(%arg0: i32) -> (i32, i32, i32) {
    %c0_i32 = arith.constant 0 : i32
    %c0_i32_0 = arith.constant 0 : i32
    %c0_i32_1 = arith.constant 0 : i32
    return %arg0, %c0_i32, %c0_i32_0 : i32, i32, i32
  }
  func.func @transform_2(%arg0: i32) -> (i32, i32) {
    %c0_i32 = arith.constant 0 : i32
    %c0_i32_0 = arith.constant 0 : i32
    %c0_i32_1 = arith.constant 0 : i32
    return %c0_i32, %c0_i32_0 : i32, i32
  }
  func.func @transform_3(%arg0: i32) -> (i32, i32) {
    %c0_i32 = arith.constant 0 : i32
    %c0_i32_0 = arith.constant 0 : i32
    %c0_i32_1 = arith.constant 0 : i32
    return %c0_i32, %c0_i32_0 : i32, i32
  }
  func.func @transform_4(%arg0: i32) -> (i32, i32) {
    %c0_i32 = arith.constant 0 : i32
    %c0_i32_0 = arith.constant 0 : i32
    %c0_i32_1 = arith.constant 0 : i32
    return %c0_i32, %c0_i32_0 : i32, i32
  }
  func.func @transform_5(%arg0: i32) -> (i32, i32) {
    %c0_i32 = arith.constant 0 : i32
    %c0_i32_0 = arith.constant 0 : i32
    %c0_i32_1 = arith.constant 0 : i32
    return %c0_i32, %c0_i32_0 : i32, i32
  }
  func.func @transform_6(%arg0: i32) -> (i32, i32) {
    %c0_i32 = arith.constant 0 : i32
    %c0_i32_0 = arith.constant 0 : i32
    %c0_i32_1 = arith.constant 0 : i32
    return %c0_i32, %c0_i32_0 : i32, i32
  }
  func.func @transform_7(%arg0: i32) -> (i32, i32) {
    %c0_i32 = arith.constant 0 : i32
    %c0_i32_0 = arith.constant 0 : i32
    %c0_i32_1 = arith.constant 0 : i32
    return %c0_i32, %c0_i32_0 : i32, i32
  }
  func.func @transform_8(%arg0: i32) -> (i32, i32) {
    %c0_i32 = arith.constant 0 : i32
    %c0_i32_0 = arith.constant 0 : i32
    %c0_i32_1 = arith.constant 0 : i32
    return %c0_i32, %c0_i32_0 : i32, i32
  }
  func.func @transform_9(%arg0: i32) -> (i32, i32) {
    %c0_i32 = arith.constant 0 : i32
    %c0_i32_0 = arith.constant 0 : i32
    %c0_i32_1 = arith.constant 0 : i32
    return %c0_i32, %c0_i32_0 : i32, i32
  }
  func.func @transform_10(%arg0: i32) -> (i32, i32) {
    %c0_i32 = arith.constant 0 : i32
    %c0_i32_0 = arith.constant 0 : i32
    %c0_i32_1 = arith.constant 0 : i32
    return %c0_i32, %c0_i32_0 : i32, i32
  }
  func.func @transform_11(%arg0: i32) -> (i32, i32) {
    %c0_i32 = arith.constant 0 : i32
    %c0_i32_0 = arith.constant 0 : i32
    %c0_i32_1 = arith.constant 0 : i32
    return %c0_i32, %c0_i32_0 : i32, i32
  }
  func.func @transform_12(%arg0: i32) -> (i32, i32) {
    %c0_i32 = arith.constant 0 : i32
    %c0_i32_0 = arith.constant 0 : i32
    %c0_i32_1 = arith.constant 0 : i32
    return %c0_i32, %c0_i32_0 : i32, i32
  }
  func.func @transform_13(%arg0: i32) -> (i32, i32, i32) {
    %c0_i32 = arith.constant 0 : i32
    %c0_i32_0 = arith.constant 0 : i32
    %c0_i32_1 = arith.constant 0 : i32
    return %arg0, %c0_i32, %c0_i32_0 : i32, i32, i32
  }
}

</mosaic_0001>

<llo_original>
// kernel: mtsp_forward.1
$region0: #{mtsp_forward.1}
  #allocation0 [shape = 'u32[]', space=smem, size = 0x4, offset = 0x4, fixed_abs, tag = 'smem constant byte address 0x4 - core index']
  #allocation1 [shape = 'u32[144,128]{1,0:T(1,128)}', space=vmem, size = 0x12000, scoped, tag = 'internal scratch']
  %s0 = inlined_call_operand.vmem [shape: s32[2,64,1], index: 0, kind: input, shape index: {}]
  %s1 = inlined_call_operand.vmem [shape: f32[2,16,4], index: 1, kind: input, shape index: {}]
  %s2 = inlined_call_operand.vmem [shape: bf16[4,16], index: 2, kind: input, shape index: {}]
  %s3 = inlined_call_operand.vmem [shape: bf16[4,16], index: 3, kind: input, shape index: {}]
  %s4 = inlined_call_operand.vmem [shape: f32[1,16], index: 4, kind: input, shape index: {}]
  %s5 = inlined_call_operand.vmem [shape: bf16[16,32], index: 5, kind: input, shape index: {}]
  %s6 = inlined_call_operand.vmem [shape: bf16[16,32], index: 6, kind: input, shape index: {}]
  %s7 = inlined_call_operand.vmem [shape: f32[1,32], index: 7, kind: input, shape index: {}]
  %s8 = inlined_call_operand.vmem [shape: bf16[32,32], index: 8, kind: input, shape index: {}]
  %s9 = inlined_call_operand.vmem [shape: bf16[32,32], index: 9, kind: input, shape index: {}]
  %s10 = inlined_call_operand.vmem [shape: f32[1,32], index: 10, kind: input, shape index: {}]
  %s11 = inlined_call_operand.vmem [shape: bf16[32,128], index: 11, kind: input, shape index: {}]
  %s12 = inlined_call_operand.vmem [shape: f32[1,128], index: 12, kind: input, shape index: {}]
  %s13 = inlined_call_operand.vmem [shape: f32[2,16,128], index: 13, kind: output, shape index: {}]
  %s14 = sld [smem:[#allocation0]]
  $region85: #{mtsp_forward.1} parent=0
    _
  %s16 = ssub.s32 1, %s14
  %s17 = scalar_select 0, %s16, %s14
  loop: start=0, step=1, limit=4
  $region2: #{mtsp_forward.1} parent=0 // loop_pre_header
    _
  $region3: #{mtsp_forward.1} parent=0 // loop_header
    %s19 = sphi 0, %s23
    %p20 = scmp.ge.s32.totalorder %s19, 4
    %s29 = sphi 0, %s31
    %s32 = sphi 0, %s29
    %s33 = sphi 0, %s32
    %s49 = sphi 0, %s33
    %s55 = sphi 0, %s57
    %s58 = sphi 0, %s55
    %s59 = sphi 0, %s58
    %s75 = sphi 0, %s59
    %s79 = sphi 0, %s79
    %s81 = sphi 0, %s79
    %s82 = sphi 0, %s81
    %s96 = sphi 0, %s82
    %s100 = sphi 0, %s100
    %s102 = sphi 0, %s100
    %s103 = sphi 0, %s102
    %s117 = sphi 0, %s103
    %s121 = sphi 0, %s121
    %s123 = sphi 0, %s121
    %s124 = sphi 0, %s123
    %s138 = sphi 0, %s124
    %s142 = sphi 0, %s142
    %s144 = sphi 0, %s142
    %s145 = sphi 0, %s144
    %s159 = sphi 0, %s145
    %s163 = sphi 0, %s163
    %s165 = sphi 0, %s163
    %s166 = sphi 0, %s165
    %s180 = sphi 0, %s166
    %s184 = sphi 0, %s184
    %s186 = sphi 0, %s184
    %s187 = sphi 0, %s186
    %s201 = sphi 0, %s187
    %s205 = sphi 0, %s205
    %s207 = sphi 0, %s205
    %s208 = sphi 0, %s207
    %s222 = sphi 0, %s208
    %s226 = sphi 0, %s226
    %s228 = sphi 0, %s226
    %s229 = sphi 0, %s228
    %s243 = sphi 0, %s229
    %s247 = sphi 0, %s247
    %s249 = sphi 0, %s247
    %s250 = sphi 0, %s249
    %s264 = sphi 0, %s250
    %s268 = sphi 0, %s268
    %s270 = sphi 0, %s268
    %s271 = sphi 0, %s270
    %s285 = sphi 0, %s271
    %s289 = sphi 0, %s289
    %s291 = sphi 0, %s289
    %s292 = sphi 0, %s291
    %s306 = sphi 0, %s292
    %s312 = sphi 0, %s314
    %s315 = sphi 0, %s312
    %s316 = sphi 0, %s315
    %s332 = sphi 0, %s316
  $region4: #{mtsp_forward.1} parent=0 // loop_header_branch
    %22 = sbr.rel (%p20) target = $region8
  $region5: #{mtsp_forward.1} parent=0 // loop_body
    %s24 = ssub.s32 %s19, 1
    %s25 = ssub.s32 %s19, 2
    %s26 = sadd.s32 %s19, 1
    %s27 = ssub.s32 %s19, %s26
    %p28 = scmp.eq.s32.totalorder %s27, 0
    %s30 = sadd.s32 %s29, 1
    %s31 = scalar_select %p28, %s29, %s30
    %p34 = pneg %p28
    %p35 = scmp.eq.s32.totalorder %s19, 1
    %p36 = por %p34, %p35
    %p37 = scmp.ne.s32.totalorder %s29, %s32
    %p38 = scmp.eq.s32.totalorder %s19, 0
    %p39 = por %p37, %p38
    %p40 = scmp.ne.s32.totalorder %s29, %s32
    %p41 = scmp.eq.s32.totalorder %s24, 1
    %p42 = por %p40, %p41
    %p43 = scmp.ne.s32.totalorder %s32, %s33
    %p44 = scmp.eq.s32.totalorder %s24, 0
    %p45 = por %p43, %p44
    %p46 = scmp.ne.s32.totalorder %s32, %s33
    %p47 = scmp.eq.s32.totalorder %s25, 1
    %p48 = por %p46, %p47
    %p50 = scmp.ne.s32.totalorder %s33, %s49
    %p51 = scmp.eq.s32.totalorder %s25, 0
    %p52 = por %p50, %p51
    %s53 = ssub.s32 %s19, %s26
    %p54 = scmp.eq.s32.totalorder %s53, 0
    %s56 = sadd.s32 %s55, 1
    %s57 = scalar_select %p54, %s55, %s56
    %p60 = pneg %p54
    %p61 = scmp.eq.s32.totalorder %s19, 1
    %p62 = por %p60, %p61
    %p63 = scmp.ne.s32.totalorder %s55, %s58
    %p64 = scmp.eq.s32.totalorder %s19, 0
    %p65 = por %p63, %p64
    %p66 = scmp.ne.s32.totalorder %s55, %s58
    %p67 = scmp.eq.s32.totalorder %s24, 1
    %p68 = por %p66, %p67
    %p69 = scmp.ne.s32.totalorder %s58, %s59
    %p70 = scmp.eq.s32.totalorder %s24, 0
    %p71 = por %p69, %p70
    %p72 = scmp.ne.s32.totalorder %s58, %s59
    %p73 = scmp.eq.s32.totalorder %s25, 1
    %p74 = por %p72, %p73
    %p76 = scmp.ne.s32.totalorder %s59, %s75
    %p77 = scmp.eq.s32.totalorder %s25, 0
    %p78 = por %p76, %p77
    %s80 = sadd.s32 %s79, 1
    %p83 = scmp.eq.s32.totalorder %s19, 1
    %p84 = scmp.ne.s32.totalorder %s79, %s81
    %p85 = scmp.eq.s32.totalorder %s19, 0
    %p86 = por %p84, %p85
    %p87 = scmp.ne.s32.totalorder %s79, %s81
    %p88 = scmp.eq.s32.totalorder %s24, 1
    %p89 = por %p87, %p88
    %p90 = scmp.ne.s32.totalorder %s81, %s82
    %p91 = scmp.eq.s32.totalorder %s24, 0
    %p92 = por %p90, %p91
    %p93 = scmp.ne.s32.totalorder %s81, %s82
    %p94 = scmp.eq.s32.totalorder %s25, 1
    %p95 = por %p93, %p94
    %p97 = scmp.ne.s32.totalorder %s82, %s96
    %p98 = scmp.eq.s32.totalorder %s25, 0
    %p99 = por %p97, %p98
    %s101 = sadd.s32 %s100, 1
    %p104 = scmp.eq.s32.totalorder %s19, 1
    %p105 = scmp.ne.s32.totalorder %s100, %s102
    %p106 = scmp.eq.s32.totalorder %s19, 0
    %p107 = por %p105, %p106
    %p108 = scmp.ne.s32.totalorder %s100, %s102
    %p109 = scmp.eq.s32.totalorder %s24, 1
    %p110 = por %p108, %p109
    %p111 = scmp.ne.s32.totalorder %s102, %s103
    %p112 = scmp.eq.s32.totalorder %s24, 0
    %p113 = por %p111, %p112
    %p114 = scmp.ne.s32.totalorder %s102, %s103
    %p115 = scmp.eq.s32.totalorder %s25, 1
    %p116 = por %p114, %p115
    %p118 = scmp.ne.s32.totalorder %s103, %s117
    %p119 = scmp.eq.s32.totalorder %s25, 0
    %p120 = por %p118, %p119
    %s122 = sadd.s32 %s121, 1
    %p125 = scmp.eq.s32.totalorder %s19, 1
    %p126 = scmp.ne.s32.totalorder %s121, %s123
    %p127 = scmp.eq.s32.totalorder %s19, 0
    %p128 = por %p126, %p127
    %p129 = scmp.ne.s32.totalorder %s121, %s123
    %p130 = scmp.eq.s32.totalorder %s24, 1
    %p131 = por %p129, %p130
    %p132 = scmp.ne.s32.totalorder %s123, %s124
    %p133 = scmp.eq.s32.totalorder %s24, 0
    %p134 = por %p132, %p133
    %p135 = scmp.ne.s32.totalorder %s123, %s124
    %p136 = scmp.eq.s32.totalorder %s25, 1
    %p137 = por %p135, %p136
    %p139 = scmp.ne.s32.totalorder %s124, %s138
    %p140 = scmp.eq.s32.totalorder %s25, 0
    %p141 = por %p139, %p140
    %s143 = sadd.s32 %s142, 1
    %p146 = scmp.eq.s32.totalorder %s19, 1
    %p147 = scmp.ne.s32.totalorder %s142, %s144
    %p148 = scmp.eq.s32.totalorder %s19, 0
    %p149 = por %p147, %p148
    %p150 = scmp.ne.s32.totalorder %s142, %s144
    %p151 = scmp.eq.s32.totalorder %s24, 1
    %p152 = por %p150, %p151
    %p153 = scmp.ne.s32.totalorder %s144, %s145
    %p154 = scmp.eq.s32.totalorder %s24, 0
    %p155 = por %p153, %p154
    %p156 = scmp.ne.s32.totalorder %s144, %s145
    %p157 = scmp.eq.s32.totalorder %s25, 1
    %p158 = por %p156, %p157
    %p160 = scmp.ne.s32.totalorder %s145, %s159
    %p161 = scmp.eq.s32.totalorder %s25, 0
    %p162 = por %p160, %p161
    %s164 = sadd.s32 %s163, 1
    %p167 = scmp.eq.s32.totalorder %s19, 1
    %p168 = scmp.ne.s32.totalorder %s163, %s165
    %p169 = scmp.eq.s32.totalorder %s19, 0
    %p170 = por %p168, %p169
    %p171 = scmp.ne.s32.totalorder %s163, %s165
    %p172 = scmp.eq.s32.totalorder %s24, 1
    %p173 = por %p171, %p172
    %p174 = scmp.ne.s32.totalorder %s165, %s166
    %p175 = scmp.eq.s32.totalorder %s24, 0
    %p176 = por %p174, %p175
    %p177 = scmp.ne.s32.totalorder %s165, %s166
    %p178 = scmp.eq.s32.totalorder %s25, 1
    %p179 = por %p177, %p178
    %p181 = scmp.ne.s32.totalorder %s166, %s180
    %p182 = scmp.eq.s32.totalorder %s25, 0
    %p183 = por %p181, %p182
    %s185 = sadd.s32 %s184, 1
    %p188 = scmp.eq.s32.totalorder %s19, 1
    %p189 = scmp.ne.s32.totalorder %s184, %s186
    %p190 = scmp.eq.s32.totalorder %s19, 0
    %p191 = por %p189, %p190
    %p192 = scmp.ne.s32.totalorder %s184, %s186
    %p193 = scmp.eq.s32.totalorder %s24, 1
    %p194 = por %p192, %p193
    %p195 = scmp.ne.s32.totalorder %s186, %s187
    %p196 = scmp.eq.s32.totalorder %s24, 0
    %p197 = por %p195, %p196
    %p198 = scmp.ne.s32.totalorder %s186, %s187
    %p199 = scmp.eq.s32.totalorder %s25, 1
    %p200 = por %p198, %p199
    %p202 = scmp.ne.s32.totalorder %s187, %s201
    %p203 = scmp.eq.s32.totalorder %s25, 0
    %p204 = por %p202, %p203
    %s206 = sadd.s32 %s205, 1
    %p209 = scmp.eq.s32.totalorder %s19, 1
    %p210 = scmp.ne.s32.totalorder %s205, %s207
    %p211 = scmp.eq.s32.totalorder %s19, 0
    %p212 = por %p210, %p211
    %p213 = scmp.ne.s32.totalorder %s205, %s207
    %p214 = scmp.eq.s32.totalorder %s24, 1
    %p215 = por %p213, %p214
    %p216 = scmp.ne.s32.totalorder %s207, %s208
    %p217 = scmp.eq.s32.totalorder %s24, 0
    %p218 = por %p216, %p217
    %p219 = scmp.ne.s32.totalorder %s207, %s208
    %p220 = scmp.eq.s32.totalorder %s25, 1
    %p221 = por %p219, %p220
    %p223 = scmp.ne.s32.totalorder %s208, %s222
    %p224 = scmp.eq.s32.totalorder %s25, 0
    %p225 = por %p223, %p224
    %s227 = sadd.s32 %s226, 1
    %p230 = scmp.eq.s32.totalorder %s19, 1
    %p231 = scmp.ne.s32.totalorder %s226, %s228
    %p232 = scmp.eq.s32.totalorder %s19, 0
    %p233 = por %p231, %p232
    %p234 = scmp.ne.s32.totalorder %s226, %s228
    %p235 = scmp.eq.s32.totalorder %s24, 1
    %p236 = por %p234, %p235
    %p237 = scmp.ne.s32.totalorder %s228, %s229
    %p238 = scmp.eq.s32.totalorder %s24, 0
    %p239 = por %p237, %p238
    %p240 = scmp.ne.s32.totalorder %s228, %s229
    %p241 = scmp.eq.s32.totalorder %s25, 1
    %p242 = por %p240, %p241
    %p244 = scmp.ne.s32.totalorder %s229, %s243
    %p245 = scmp.eq.s32.totalorder %s25, 0
    %p246 = por %p244, %p245
    %s248 = sadd.s32 %s247, 1
    %p251 = scmp.eq.s32.totalorder %s19, 1
    %p252 = scmp.ne.s32.totalorder %s247, %s249
    %p253 = scmp.eq.s32.totalorder %s19, 0
    %p254 = por %p252, %p253
    %p255 = scmp.ne.s32.totalorder %s247, %s249
    %p256 = scmp.eq.s32.totalorder %s24, 1
    %p257 = por %p255, %p256
    %p258 = scmp.ne.s32.totalorder %s249, %s250
    %p259 = scmp.eq.s32.totalorder %s24, 0
    %p260 = por %p258, %p259
    %p261 = scmp.ne.s32.totalorder %s249, %s250
    %p262 = scmp.eq.s32.totalorder %s25, 1
    %p263 = por %p261, %p262
    %p265 = scmp.ne.s32.totalorder %s250, %s264
    %p266 = scmp.eq.s32.totalorder %s25, 0
    %p267 = por %p265, %p266
    %s269 = sadd.s32 %s268, 1
    %p272 = scmp.eq.s32.totalorder %s19, 1
    %p273 = scmp.ne.s32.totalorder %s268, %s270
    %p274 = scmp.eq.s32.totalorder %s19, 0
    %p275 = por %p273, %p274
    %p276 = scmp.ne.s32.totalorder %s268, %s270
    %p277 = scmp.eq.s32.totalorder %s24, 1
    %p278 = por %p276, %p277
    %p279 = scmp.ne.s32.totalorder %s270, %s271
    %p280 = scmp.eq.s32.totalorder %s24, 0
    %p281 = por %p279, %p280
    %p282 = scmp.ne.s32.totalorder %s270, %s271
    %p283 = scmp.eq.s32.totalorder %s25, 1
    %p284 = por %p282, %p283
    %p286 = scmp.ne.s32.totalorder %s271, %s285
    %p287 = scmp.eq.s32.totalorder %s25, 0
    %p288 = por %p286, %p287
    %s290 = sadd.s32 %s289, 1
    %p293 = scmp.eq.s32.totalorder %s19, 1
    %p294 = scmp.ne.s32.totalorder %s289, %s291
    %p295 = scmp.eq.s32.totalorder %s19, 0
    %p296 = por %p294, %p295
    %p297 = scmp.ne.s32.totalorder %s289, %s291
    %p298 = scmp.eq.s32.totalorder %s24, 1
    %p299 = por %p297, %p298
    %p300 = scmp.ne.s32.totalorder %s291, %s292
    %p301 = scmp.eq.s32.totalorder %s24, 0
    %p302 = por %p300, %p301
    %p303 = scmp.ne.s32.totalorder %s291, %s292
    %p304 = scmp.eq.s32.totalorder %s25, 1
    %p305 = por %p303, %p304
    %p307 = scmp.ne.s32.totalorder %s292, %s306
    %p308 = scmp.eq.s32.totalorder %s25, 0
    %p309 = por %p307, %p308
    %s310 = ssub.s32 %s19, %s26
    %p311 = scmp.eq.s32.totalorder %s310, 0
    %s313 = sadd.s32 %s312, 1
    %s314 = scalar_select %p311, %s312, %s313
    %p317 = pneg %p311
    %p318 = scmp.eq.s32.totalorder %s19, 1
    %p319 = por %p317, %p318
    %p320 = scmp.ne.s32.totalorder %s312, %s315
    %p321 = scmp.eq.s32.totalorder %s19, 0
    %p322 = por %p320, %p321
    %p323 = scmp.ne.s32.totalorder %s312, %s315
    %p324 = scmp.eq.s32.totalorder %s24, 1
    %p325 = por %p323, %p324
    %p326 = scmp.ne.s32.totalorder %s315, %s316
    %p327 = scmp.eq.s32.totalorder %s24, 0
    %p328 = por %p326, %p327
    %p329 = scmp.ne.s32.totalorder %s315, %s316
    %p330 = scmp.eq.s32.totalorder %s25, 1
    %p331 = por %p329, %p330
    %p333 = scmp.ne.s32.totalorder %s316, %s332
    %p334 = scmp.eq.s32.totalorder %s25, 0
    %p335 = por %p333, %p334
    %p336 = scmp.le.s32.totalorder 1, %s19
    %p337 = scmp.lt.s32.totalorder %s19, 3
    %p338 = pnand %p336, %p337
    %p339 = pneg %p338
    // Predicated region
    $region9: #{mtsp_forward.1} parent=5 // pred_check
      _
    $region10: #{mtsp_forward.1} parent=5 // pred_check_branch
      %341 = sbr.rel (%p338) target = $region12
    $region11: #{mtsp_forward.1} parent=5 // pred_region
      %s342 = ssub.s32 %s19, 1
      // Predicated region
      $region13: #{mtsp_forward.1} parent=11 // pred_check
        %p343 = pneg %p92
      $region14: #{mtsp_forward.1} parent=11 // pred_check_branch
        %345 = sbr.rel (%p343) target = $region16
      $region15: #{mtsp_forward.1} parent=11 // pred_region
        _
      $region16: #{mtsp_forward.1} parent=11 // pred_fallthru
        _
      // Predicated region
      $region17: #{mtsp_forward.1} parent=11 // pred_check
        %p346 = pneg %p113
      $region18: #{mtsp_forward.1} parent=11 // pred_check_branch
        %348 = sbr.rel (%p346) target = $region20
      $region19: #{mtsp_forward.1} parent=11 // pred_region
        _
      $region20: #{mtsp_forward.1} parent=11 // pred_fallthru
        _
      // Predicated region
      $region21: #{mtsp_forward.1} parent=11 // pred_check
        %p349 = pneg %p134
      $region22: #{mtsp_forward.1} parent=11 // pred_check_branch
        %351 = sbr.rel (%p349) target = $region24
      $region23: #{mtsp_forward.1} parent=11 // pred_region
        _
      $region24: #{mtsp_forward.1} parent=11 // pred_fallthru
        _
      // Predicated region
      $region25: #{mtsp_forward.1} parent=11 // pred_check
        %p352 = pneg %p155
      $region26: #{mtsp_forward.1} parent=11 // pred_check_branch
        %354 = sbr.rel (%p352) target = $region28
      $region27: #{mtsp_forward.1} parent=11 // pred_region
        _
      $region28: #{mtsp_forward.1} parent=11 // pred_fallthru
        _
      // Predicated region
      $region29: #{mtsp_forward.1} parent=11 // pred_check
        %p355 = pneg %p176
      $region30: #{mtsp_forward.1} parent=11 // pred_check_branch
        %357 = sbr.rel (%p355) target = $region32
      $region31: #{mtsp_forward.1} parent=11 // pred_region
        _
      $region32: #{mtsp_forward.1} parent=11 // pred_fallthru
        _
      // Predicated region
      $region33: #{mtsp_forward.1} parent=11 // pred_check
        %p358 = pneg %p197
      $region34: #{mtsp_forward.1} parent=11 // pred_check_branch
        %360 = sbr.rel (%p358) target = $region36
      $region35: #{mtsp_forward.1} parent=11 // pred_region
        _
      $region36: #{mtsp_forward.1} parent=11 // pred_fallthru
        _
      // Predicated region
      $region37: #{mtsp_forward.1} parent=11 // pred_check
        %p361 = pneg %p218
      $region38: #{mtsp_forward.1} parent=11 // pred_check_branch
        %363 = sbr.rel (%p361) target = $region40
      $region39: #{mtsp_forward.1} parent=11 // pred_region
        _
      $region40: #{mtsp_forward.1} parent=11 // pred_fallthru
        _
      // Predicated region
      $region41: #{mtsp_forward.1} parent=11 // pred_check
        %p364 = pneg %p239
      $region42: #{mtsp_forward.1} parent=11 // pred_check_branch
        %366 = sbr.rel (%p364) target = $region44
      $region43: #{mtsp_forward.1} parent=11 // pred_region
        _
      $region44: #{mtsp_forward.1} parent=11 // pred_fallthru
        _
      // Predicated region
      $region45: #{mtsp_forward.1} parent=11 // pred_check
        %p367 = pneg %p260
      $region46: #{mtsp_forward.1} parent=11 // pred_check_branch
        %369 = sbr.rel (%p367) target = $region48
      $region47: #{mtsp_forward.1} parent=11 // pred_region
        _
      $region48: #{mtsp_forward.1} parent=11 // pred_fallthru
        _
      // Predicated region
      $region49: #{mtsp_forward.1} parent=11 // pred_check
        %p370 = pneg %p281
      $region50: #{mtsp_forward.1} parent=11 // pred_check_branch
        %372 = sbr.rel (%p370) target = $region52
      $region51: #{mtsp_forward.1} parent=11 // pred_region
        _
      $region52: #{mtsp_forward.1} parent=11 // pred_fallthru
        _
      // Predicated region
      $region53: #{mtsp_forward.1} parent=11 // pred_check
        %p373 = pneg %p302
      $region54: #{mtsp_forward.1} parent=11 // pred_check_branch
        %375 = sbr.rel (%p373) target = $region56
      $region55: #{mtsp_forward.1} parent=11 // pred_region
        _
      $region56: #{mtsp_forward.1} parent=11 // pred_fallthru
        _
    $region12: #{mtsp_forward.1} parent=5 // pred_fallthru
      _
    %p376 = scmp.lt.s32.totalorder %s19, 2
    // Predicated region
    $region57: #{mtsp_forward.1} parent=5 // pred_check
      %p377 = pneg %p376
    $region58: #{mtsp_forward.1} parent=5 // pred_check_branch
      %379 = sbr.rel (%p377) target = $region60
    $region59: #{mtsp_forward.1} parent=5 // pred_region
      // Predicated region
      $region61: #{mtsp_forward.1} parent=59 // pred_check
        %p380 = pneg %p39
      $region62: #{mtsp_forward.1} parent=59 // pred_check_branch
        %382 = sbr.rel (%p380) target = $region64
      $region63: #{mtsp_forward.1} parent=59 // pred_region
        %p383 = scmp.lt.s32.totalorder %s19, 1
        %s384 = scalar_select %p383, %s19, 1
        %s385 = smul.addr %s384, 8
        %s386 = smul.addr %s385, 8
        %s387 = scalar_lea.vmem %s0, %s386
      $region64: #{mtsp_forward.1} parent=59 // pred_fallthru
        _
      // Predicated region
      $region65: #{mtsp_forward.1} parent=59 // pred_check
        %p388 = pneg %p65
      $region66: #{mtsp_forward.1} parent=59 // pred_check_branch
        %390 = sbr.rel (%p388) target = $region68
      $region67: #{mtsp_forward.1} parent=59 // pred_region
        %p391 = scmp.lt.s32.totalorder %s19, 1
        %s392 = scalar_select %p391, %s19, 1
        %s393 = smul.addr %s392, 2
        %s394 = smul.addr %s393, 8
        %s395 = scalar_lea.vmem %s1, %s394
      $region68: #{mtsp_forward.1} parent=59 // pred_fallthru
        _
    $region60: #{mtsp_forward.1} parent=5 // pred_fallthru
      _
    %p396 = scmp.le.s32.totalorder 1, %s19
    %p397 = scmp.lt.s32.totalorder %s19, 3
    %p398 = pnand %p396, %p397
    %p399 = pneg %p398
    // Predicated region
    $region69: #{mtsp_forward.1} parent=5 // pred_check
      _
    $region70: #{mtsp_forward.1} parent=5 // pred_check_branch
      %401 = sbr.rel (%p398) target = $region72
    $region71: #{mtsp_forward.1} parent=5 // pred_region
      %s402 = ssub.s32 %s19, 1
      %p403 = scmp.lt.s32.totalorder %s24, 1
      %s404 = scalar_select %p403, %s24, 1
      %s405 = smul.addr %s404, 8
      %s406 = smul.addr %s405, 8
      %s407 = scalar_lea.vmem %s0, %s406
      %p408 = pneg %p45
      %p409 = pneg %p42
      %p410 = scmp.lt.s32.totalorder %s24, 1
      %s411 = scalar_select %p410, %s24, 1
      %s412 = smul.addr %s411, 2
      %s413 = smul.addr %s412, 8
      %s414 = scalar_lea.vmem %s1, %s413
      %p415 = pneg %p71
      %p416 = pneg %p68
      %p417 = pneg %p92
      %p418 = pneg %p89
      %p419 = pneg %p113
      %p420 = pneg %p110
      %p421 = pneg %p134
      %p422 = pneg %p131
      %p423 = pneg %p155
      %p424 = pneg %p152
      %p425 = pneg %p176
      %p426 = pneg %p173
      %p427 = pneg %p197
      %p428 = pneg %p194
      %p429 = pneg %p218
      %p430 = pneg %p215
      %p431 = pneg %p239
      %p432 = pneg %p236
      %p433 = pneg %p260
      %p434 = pneg %p257
      %p435 = pneg %p281
      %p436 = pneg %p278
      %p437 = pneg %p302
      %p438 = pneg %p299
      %p439 = pneg %p328
      %p440 = pneg %p325
      %p441 = scmp.lt.s32.totalorder %s24, 1
      %s442 = scalar_select %p441, %s24, 1
      %s443 = smul.addr %s442, 2
      %s444 = smul.addr %s443, 8
      %s445 = scalar_lea.vmem %s13, %s444
      %p446 = scmp.lt.s32.totalorder %s24, 1
      %s447 = scalar_select %p446, %s24, 1
      %s448 = smul.addr %s447, 8
      %s449 = smul.addr %s448, 8
      %s450 = scalar_lea.vmem %s0, %s449
      %p451 = scmp.lt.s32.totalorder %s24, 1
      %s452 = scalar_select %p451, %s24, 1
      %s453 = smul.addr %s452, 2
      %s454 = smul.addr %s453, 8
      %s455 = scalar_lea.vmem %s1, %s454
      %p456 = scmp.lt.s32.totalorder %s24, 1
      %s457 = scalar_select %p456, %s24, 1
      %s458 = smul.addr %s457, 2
      %s459 = smul.addr %s458, 8
      %s460 = scalar_lea.vmem %s13, %s459
      %v462 = vld [vmem:[%s455] sm:$0xff]
      %v463 = vld [vmem:[%s455 + $0x8] sm:$0xff]
      %v464 = vld [vmem:[%s450] sm:$0xff]
      %v465 = vld [vmem:[%s450 + $0x8] sm:$0xff]
      %v466 = vld [vmem:[%s450 + $0x10] sm:$0xff]
      %v467 = vld [vmem:[%s450 + $0x18] sm:$0xff]
      %v468 = vld [vmem:[%s450 + $0x20] sm:$0xff]
      %v469 = vld [vmem:[%s450 + $0x28] sm:$0xff]
      %v470 = vld [vmem:[%s450 + $0x30] sm:$0xff]
      %v471 = vld [vmem:[%s450 + $0x38] sm:$0xff]
      %v472 = vlaneseq
      %v473 = vand.u32 %v472, 127
      %474 = vset.pattern.permute.xlu0 0
      %475 = vperm.xlu0 %474, %v464
      %v476 = vpop.permute.xlu0 %475
      %477 = vset.pattern.permute.xlu0 0
      %478 = vperm.xlu0 %477, %v465
      %v479 = vpop.permute.xlu0 %478
      %480 = vset.pattern.permute.xlu0 0
      %481 = vperm.xlu0 %480, %v466
      %v482 = vpop.permute.xlu0 %481
      %483 = vset.pattern.permute.xlu0 0
      %484 = vperm.xlu0 %483, %v467
      %v485 = vpop.permute.xlu0 %484
      %486 = vset.pattern.permute.xlu0 0
      %487 = vperm.xlu0 %486, %v468
      %v488 = vpop.permute.xlu0 %487
      %489 = vset.pattern.permute.xlu0 0
      %490 = vperm.xlu0 %489, %v469
      %v491 = vpop.permute.xlu0 %490
      %492 = vset.pattern.permute.xlu0 0
      %493 = vperm.xlu0 %492, %v470
      %v494 = vpop.permute.xlu0 %493
      %495 = vset.pattern.permute.xlu0 0
      %496 = vperm.xlu0 %495, %v471
      %v497 = vpop.permute.xlu0 %496
      %vm498 = vcmp.eq.s32.totalorder %v476, %v473
      %vm499 = vcmp.eq.s32.totalorder %v479, %v473
      %vm500 = vcmp.eq.s32.totalorder %v482, %v473
      %vm501 = vcmp.eq.s32.totalorder %v485, %v473
      %vm502 = vcmp.eq.s32.totalorder %v488, %v473
      %vm503 = vcmp.eq.s32.totalorder %v491, %v473
      %vm504 = vcmp.eq.s32.totalorder %v494, %v473
      %vm505 = vcmp.eq.s32.totalorder %v497, %v473
      %v506 = vsel %vm498, 1, 0
      %v507 = vsel %vm499, 1, 0
      %v508 = vsel %vm500, 1, 0
      %v509 = vsel %vm501, 1, 0
      %v510 = vsel %vm502, 1, 0
      %v511 = vsel %vm503, 1, 0
      %v512 = vsel %vm504, 1, 0
      %v513 = vsel %vm505, 1, 0
      %v514 = vcvt.s32.f32 %v506
      %v515 = vcvt.s32.f32 %v507
      %v516 = vcvt.s32.f32 %v508
      %v517 = vcvt.s32.f32 %v509
      %v518 = vcvt.s32.f32 %v510
      %v519 = vcvt.s32.f32 %v511
      %v520 = vcvt.s32.f32 %v512
      %v521 = vcvt.s32.f32 %v513
      %v522 = vpack.c.bf16 %v515, %v514
      %v523 = vpack.c.bf16 %v517, %v516
      %v524 = vpack.c.bf16 %v519, %v518
      %v525 = vpack.c.bf16 %v521, %v520
      %v526 = vpack.c.bf16 %v463, %v462
      %v527 = vld [vmem:[%s2] sm:$0x3]
      %vm528 = vcmask 31744
      %v530 = vsel %vm528, %v526, 0
      %vm532 = vcmask 1041408
      %v534 = vsel %vm532, %v527, 0
      %536 = vmatprep.subr.bf16.mxu0 0
      %537 = vmatpush1.bf16.msra.mxu0 0
      %538 = vmatprep.subr.bf16.mxu0 0
      %539 = vmatpush1.bf16.msra.mxu0 0
      %540 = vmatprep.subr.bf16.mxu0 0
      %541 = vmatpush1.bf16.msra.mxu0 0
      %542 = vmatprep.subr.bf16.mxu0 0
      %543 = vmatpush1.bf16.msra.mxu0 0
      %544 = vmatprep.subr.bf16.mxu0 0
      %545 = vmatpush1.bf16.msra.mxu0 0
      %546 = vmatprep.subr.bf16.mxu0 0
      %547 = vmatpush1.bf16.msra.mxu0 0
      %548 = vmatprep.subr.bf16.mxu0 0
      %549 = vmatpush1.bf16.msra.mxu0 0
      %550 = vmatprep.subr.bf16.mxu0 0
      %551 = vmatpush1.bf16.msra.mxu0 %v534
      %552 = vmatprep.subr.bf16.mxu0 0
      %553 = vmatpush2.bf16.msra.mxu0 0
      %554 = vmatprep.subr.bf16.mxu0 0
      %555 = vmatpush2.bf16.msra.mxu0 0
      %556 = vmatprep.subr.bf16.mxu0 0
      %557 = vmatpush2.bf16.msra.mxu0 0
      %558 = vmatprep.subr.bf16.mxu0 0
      %559 = vmatpush2.bf16.msra.mxu0 0
      %560 = vmatprep.subr.bf16.mxu0 0
      %561 = vmatpush2.bf16.msra.mxu0 0
      %562 = vmatprep.subr.bf16.mxu0 0
      %563 = vmatpush2.bf16.msra.mxu0 0
      %564 = vmatprep.subr.bf16.mxu0 0
      %565 = vmatpush2.bf16.msra.mxu0 0
      %566 = vmatprep.subr.bf16.mxu0 0
      %567 = vmatpush2.bf16.msra.mxu0 0
      %568 = vmatprep.mubr.bf16.mxu0 0
      %569 = vmatmul.mubr.bf16.gmra.mxu0 %v530
      %v570 = vpop.f32.mrf.mxu0
      %v571 = vadd.f32 0.0, %v570
      %v572 = vpop.f32.mrf.mxu0
      %v573 = vpop.f32.mrf.mxu0
      %v574 = vadd.f32 0.0, %v573
      %v575 = vpop.f32.mrf.mxu0
      %576 = vdwg.mxu0
      %v577 = vld [vmem:[%s3] sm:$0x3]
      %v578 = vld [vmem:[%s4] sm:$0x1]
      %v580 = vlaneseq
      %v581 = vshrl.u32 %v580, 7
      %v582 = vsub.s32 0, %v581
      %v583 = vrot.slane %v578, %v582
      %v586 = vsel %vm532, %v577, 0
      %588 = vmatprep.subr.bf16.mxu0 0
      %589 = vmatpush1.bf16.msra.mxu0 0
      %590 = vmatprep.subr.bf16.mxu0 0
      %591 = vmatpush1.bf16.msra.mxu0 0
      %592 = vmatprep.subr.bf16.mxu0 0
      %593 = vmatpush1.bf16.msra.mxu0 0
      %594 = vmatprep.subr.bf16.mxu0 0
      %595 = vmatpush1.bf16.msra.mxu0 0
      %596 = vmatprep.subr.bf16.mxu0 0
      %597 = vmatpush1.bf16.msra.mxu0 0
      %598 = vmatprep.subr.bf16.mxu0 0
      %599 = vmatpush1.bf16.msra.mxu0 0
      %600 = vmatprep.subr.bf16.mxu0 0
      %601 = vmatpush1.bf16.msra.mxu0 0
      %602 = vmatprep.subr.bf16.mxu0 0
      %603 = vmatpush1.bf16.msra.mxu0 %v586
      %604 = vmatprep.subr.bf16.mxu0 0
      %605 = vmatpush2.bf16.msra.mxu0 0
      %606 = vmatprep.subr.bf16.mxu0 0
      %607 = vmatpush2.bf16.msra.mxu0 0
      %608 = vmatprep.subr.bf16.mxu0 0
      %609 = vmatpush2.bf16.msra.mxu0 0
      %610 = vmatprep.subr.bf16.mxu0 0
      %611 = vmatpush2.bf16.msra.mxu0 0
      %612 = vmatprep.subr.bf16.mxu0 0
      %613 = vmatpush2.bf16.msra.mxu0 0
      %614 = vmatprep.subr.bf16.mxu0 0
      %615 = vmatpush2.bf16.msra.mxu0 0
      %616 = vmatprep.subr.bf16.mxu0 0
      %617 = vmatpush2.bf16.msra.mxu0 0
      %618 = vmatprep.subr.bf16.mxu0 0
      %619 = vmatpush2.bf16.msra.mxu0 0
      %620 = vmatprep.mubr.bf16.mxu0 0
      %621 = vmatmul.mubr.bf16.gmra.mxu0 %v530
      %v622 = vpop.f32.mrf.mxu0
      %v623 = vadd.f32 %v583, %v622
      %v624 = vpop.f32.mrf.mxu0
      %v625 = vpop.f32.mrf.mxu0
      %v626 = vadd.f32 %v583, %v625
      %v627 = vpop.f32.mrf.mxu0
      %628 = vdwg.mxu0
      %v629 = vpack.c.bf16 %v574, %v571
      %vm630 = vcmask 130048
      %v632 = vsel %vm630, %v522, 0
      %v635 = vsel %vm630, %v523, 0
      %v638 = vsel %vm630, %v524, 0
      %v641 = vsel %vm630, %v525, 0
      %643 = vmatprep.subr.bf16.mxu0 0
      %644 = vmatpush1.bf16.msra.mxu0 0
      %645 = vmatprep.subr.bf16.mxu0 0
      %646 = vmatpush1.bf16.msra.mxu0 0
      %647 = vmatprep.subr.bf16.mxu0 0
      %648 = vmatpush1.bf16.msra.mxu0 0
      %649 = vmatprep.subr.bf16.mxu0 0
      %650 = vmatpush1.bf16.msra.mxu0 0
      %651 = vmatprep.subr.bf16.mxu0 0
      %652 = vmatpush1.bf16.msra.mxu0 0
      %653 = vmatprep.subr.bf16.mxu0 0
      %654 = vmatpush1.bf16.msra.mxu0 0
      %655 = vmatprep.subr.bf16.mxu0 0
      %656 = vmatpush1.bf16.msra.mxu0 0
      %657 = vmatprep.subr.bf16.mxu0 0
      %658 = vmatpush1.bf16.msra.mxu0 %v629
      %659 = vmatprep.subr.bf16.mxu0 0
      %660 = vmatpush2.bf16.msra.mxu0 0
      %661 = vmatprep.subr.bf16.mxu0 0
      %662 = vmatpush2.bf16.msra.mxu0 0
      %663 = vmatprep.subr.bf16.mxu0 0
      %664 = vmatpush2.bf16.msra.mxu0 0
      %665 = vmatprep.subr.bf16.mxu0 0
      %666 = vmatpush2.bf16.msra.mxu0 0
      %667 = vmatprep.subr.bf16.mxu0 0
      %668 = vmatpush2.bf16.msra.mxu0 0
      %669 = vmatprep.subr.bf16.mxu0 0
      %670 = vmatpush2.bf16.msra.mxu0 0
      %671 = vmatprep.subr.bf16.mxu0 0
      %672 = vmatpush2.bf16.msra.mxu0 0
      %673 = vmatprep.subr.bf16.mxu0 0
      %674 = vmatpush2.bf16.msra.mxu0 0
      %675 = vmatprep.mubr.bf16.mxu0 0
      %676 = vmatmul.mubr.bf16.gmra.mxu0 %v632
      %v677 = vpop.f32.mrf.mxu0
      %v678 = vadd.f32 0.0, %v677
      %v679 = vpop.f32.mrf.mxu0
      %v680 = vpop.f32.mrf.mxu0
      %v681 = vadd.f32 0.0, %v680
      %v682 = vpop.f32.mrf.mxu0
      %683 = vmatprep.mubr.bf16.mxu0 0
      %684 = vmatmul.mubr.bf16.gmra.mxu0 %v635
      %v685 = vpop.f32.mrf.mxu0
      %v686 = vadd.f32 0.0, %v685
      %v687 = vpop.f32.mrf.mxu0
      %v688 = vpop.f32.mrf.mxu0
      %v689 = vadd.f32 0.0, %v688
      %v690 = vpop.f32.mrf.mxu0
      %691 = vmatprep.mubr.bf16.mxu0 0
      %692 = vmatmul.mubr.bf16.gmra.mxu0 %v638
      %v693 = vpop.f32.mrf.mxu0
      %v694 = vadd.f32 0.0, %v693
      %v695 = vpop.f32.mrf.mxu0
      %v696 = vpop.f32.mrf.mxu0
      %v697 = vadd.f32 0.0, %v696
      %v698 = vpop.f32.mrf.mxu0
      %699 = vmatprep.mubr.bf16.mxu0 0
      %700 = vmatmul.mubr.bf16.gmra.mxu0 %v641
      %v701 = vpop.f32.mrf.mxu0
      %v702 = vadd.f32 0.0, %v701
      %v703 = vpop.f32.mrf.mxu0
      %v704 = vpop.f32.mrf.mxu0
      %v705 = vadd.f32 0.0, %v704
      %v706 = vpop.f32.mrf.mxu0
      %707 = vdwg.mxu0
      %v708 = vadd.f32 %v678, %v623
      %v709 = vadd.f32 %v681, %v626
      %v710 = vadd.f32 %v686, %v623
      %v711 = vadd.f32 %v689, %v626
      %v712 = vadd.f32 %v694, %v623
      %v713 = vadd.f32 %v697, %v626
      %v714 = vadd.f32 %v702, %v623
      %v715 = vadd.f32 %v705, %v626
      %v716 = vmax.f32 %v708, 0.0
      %v717 = vmax.f32 %v709, 0.0
      %v718 = vmax.f32 %v710, 0.0
      %v719 = vmax.f32 %v711, 0.0
      %v720 = vmax.f32 %v712, 0.0
      %v721 = vmax.f32 %v713, 0.0
      %v722 = vmax.f32 %v714, 0.0
      %v723 = vmax.f32 %v715, 0.0
      %v724 = vsel %vm630, %v716, -inf
      %v725 = vsel %vm630, %v718, -inf
      %v726 = vsel %vm630, %v720, -inf
      %v727 = vmax.f32 %v724, %v726
      %v728 = vsel %vm630, %v722, -inf
      %v729 = vmax.f32 %v725, %v728
      %v730 = vmax.f32 %v727, %v729
      %v731 = vsel %vm630, %v717, -inf
      %v732 = vsel %vm630, %v719, -inf
      %v733 = vsel %vm630, %v721, -inf
      %v734 = vmax.f32 %v731, %v733
      %v735 = vsel %vm630, %v723, -inf
      %v736 = vmax.f32 %v732, %v735
      %v737 = vmax.f32 %v734, %v736
      %v738 = vpack.c.bf16 %v737, %v730
      %v739 = vld [vmem:[%s5] sm:$0xf]
      %v740 = vld [vmem:[%s5 + $0x4] sm:$0xf]
      %v743 = vunpack.c.l.b16 %v739
      %v744 = vunpack.c.l.b16 %v740
      %v745 = vpack.c.b16 %v744, %v743
      %v748 = vsel %vm630, %v738, 0
      %750 = vmatprep.subr.bf16.mxu0 0
      %751 = vmatpush1.bf16.msra.mxu0 0
      %752 = vmatprep.subr.bf16.mxu0 0
      %753 = vmatpush1.bf16.msra.mxu0 0
      %754 = vmatprep.subr.bf16.mxu0 0
      %755 = vmatpush1.bf16.msra.mxu0 0
      %756 = vmatprep.subr.bf16.mxu0 0
      %757 = vmatpush1.bf16.msra.mxu0 0
      %758 = vmatprep.subr.bf16.mxu0 0
      %759 = vmatpush1.bf16.msra.mxu0 0
      %760 = vmatprep.subr.bf16.mxu0 0
      %761 = vmatpush1.bf16.msra.mxu0 0
      %762 = vmatprep.subr.bf16.mxu0 0
      %763 = vmatpush1.bf16.msra.mxu0 0
      %764 = vmatprep.subr.bf16.mxu0 0
      %765 = vmatpush1.bf16.msra.mxu0 %v745
      %766 = vmatprep.subr.bf16.mxu0 0
      %767 = vmatpush2.bf16.msra.mxu0 0
      %768 = vmatprep.subr.bf16.mxu0 0
      %769 = vmatpush2.bf16.msra.mxu0 0
      %770 = vmatprep.subr.bf16.mxu0 0
      %771 = vmatpush2.bf16.msra.mxu0 0
      %772 = vmatprep.subr.bf16.mxu0 0
      %773 = vmatpush2.bf16.msra.mxu0 0
      %774 = vmatprep.subr.bf16.mxu0 0
      %775 = vmatpush2.bf16.msra.mxu0 0
      %776 = vmatprep.subr.bf16.mxu0 0
      %777 = vmatpush2.bf16.msra.mxu0 0
      %778 = vmatprep.subr.bf16.mxu0 0
      %779 = vmatpush2.bf16.msra.mxu0 0
      %780 = vmatprep.subr.bf16.mxu0 0
      %781 = vmatpush2.bf16.msra.mxu0 0
      %782 = vmatprep.mubr.bf16.mxu0 0
      %783 = vmatmul.mubr.bf16.gmra.mxu0 %v748
      %v784 = vpop.f32.mrf.mxu0
      %v785 = vadd.f32 0.0, %v784
      %v786 = vpop.f32.mrf.mxu0
      %v787 = vpop.f32.mrf.mxu0
      %v788 = vadd.f32 0.0, %v787
      %v789 = vpop.f32.mrf.mxu0
      %790 = vdwg.mxu0
      %v791 = vld [vmem:[%s6] sm:$0xf]
      %v792 = vld [vmem:[%s6 + $0x4] sm:$0xf]
      %v793 = vld [vmem:[%s7] sm:$0x1]
      %v795 = vlaneseq
      %v796 = vshrl.u32 %v795, 7
      %v797 = vsub.s32 0, %v796
      %v798 = vrot.slane %v793, %v797
      %v802 = vunpack.c.l.b16 %v791
      %v803 = vunpack.c.l.b16 %v792
      %v804 = vpack.c.b16 %v803, %v802
      %806 = vmatprep.subr.bf16.mxu0 0
      %807 = vmatpush1.bf16.msra.mxu0 0
      %808 = vmatprep.subr.bf16.mxu0 0
      %809 = vmatpush1.bf16.msra.mxu0 0
      %810 = vmatprep.subr.bf16.mxu0 0
      %811 = vmatpush1.bf16.msra.mxu0 0
      %812 = vmatprep.subr.bf16.mxu0 0
      %813 = vmatpush1.bf16.msra.mxu0 0
      %814 = vmatprep.subr.bf16.mxu0 0
      %815 = vmatpush1.bf16.msra.mxu0 0
      %816 = vmatprep.subr.bf16.mxu0 0
      %817 = vmatpush1.bf16.msra.mxu0 0
      %818 = vmatprep.subr.bf16.mxu0 0
      %819 = vmatpush1.bf16.msra.mxu0 0
      %820 = vmatprep.subr.bf16.mxu0 0
      %821 = vmatpush1.bf16.msra.mxu0 %v804
      %822 = vmatprep.subr.bf16.mxu0 0
      %823 = vmatpush2.bf16.msra.mxu0 0
      %824 = vmatprep.subr.bf16.mxu0 0
      %825 = vmatpush2.bf16.msra.mxu0 0
      %826 = vmatprep.subr.bf16.mxu0 0
      %827 = vmatpush2.bf16.msra.mxu0 0
      %828 = vmatprep.subr.bf16.mxu0 0
      %829 = vmatpush2.bf16.msra.mxu0 0
      %830 = vmatprep.subr.bf16.mxu0 0
      %831 = vmatpush2.bf16.msra.mxu0 0
      %832 = vmatprep.subr.bf16.mxu0 0
      %833 = vmatpush2.bf16.msra.mxu0 0
      %834 = vmatprep.subr.bf16.mxu0 0
      %835 = vmatpush2.bf16.msra.mxu0 0
      %836 = vmatprep.subr.bf16.mxu0 0
      %837 = vmatpush2.bf16.msra.mxu0 0
      %838 = vmatprep.mubr.bf16.mxu0 0
      %839 = vmatmul.mubr.bf16.gmra.mxu0 %v748
      %v840 = vpop.f32.mrf.mxu0
      %v841 = vadd.f32 %v798, %v840
      %v842 = vpop.f32.mrf.mxu0
      %v843 = vpop.f32.mrf.mxu0
      %v844 = vadd.f32 %v798, %v843
      %v845 = vpop.f32.mrf.mxu0
      %846 = vdwg.mxu0
      %v847 = vpack.c.bf16 %v788, %v785
      %848 = vmatprep.subr.bf16.mxu0 0
      %849 = vmatpush1.bf16.msra.mxu0 0
      %850 = vmatprep.subr.bf16.mxu0 0
      %851 = vmatpush1.bf16.msra.mxu0 0
      %852 = vmatprep.subr.bf16.mxu0 0
      %853 = vmatpush1.bf16.msra.mxu0 0
      %854 = vmatprep.subr.bf16.mxu0 0
      %855 = vmatpush1.bf16.msra.mxu0 0
      %856 = vmatprep.subr.bf16.mxu0 0
      %857 = vmatpush1.bf16.msra.mxu0 0
      %858 = vmatprep.subr.bf16.mxu0 0
      %859 = vmatpush1.bf16.msra.mxu0 0
      %860 = vmatprep.subr.bf16.mxu0 0
      %861 = vmatpush1.bf16.msra.mxu0 0
      %862 = vmatprep.subr.bf16.mxu0 0
      %863 = vmatpush1.bf16.msra.mxu0 %v847
      %864 = vmatprep.subr.bf16.mxu0 0
      %865 = vmatpush2.bf16.msra.mxu0 0
      %866 = vmatprep.subr.bf16.mxu0 0
      %867 = vmatpush2.bf16.msra.mxu0 0
      %868 = vmatprep.subr.bf16.mxu0 0
      %869 = vmatpush2.bf16.msra.mxu0 0
      %870 = vmatprep.subr.bf16.mxu0 0
      %871 = vmatpush2.bf16.msra.mxu0 0
      %872 = vmatprep.subr.bf16.mxu0 0
      %873 = vmatpush2.bf16.msra.mxu0 0
      %874 = vmatprep.subr.bf16.mxu0 0
      %875 = vmatpush2.bf16.msra.mxu0 0
      %876 = vmatprep.subr.bf16.mxu0 0
      %877 = vmatpush2.bf16.msra.mxu0 0
      %878 = vmatprep.subr.bf16.mxu0 0
      %879 = vmatpush2.bf16.msra.mxu0 0
      %880 = vmatprep.mubr.bf16.mxu0 0
      %881 = vmatmul.mubr.bf16.gmra.mxu0 %v632
      %v882 = vpop.f32.mrf.mxu0
      %v883 = vadd.f32 0.0, %v882
      %v884 = vpop.f32.mrf.mxu0
      %v885 = vpop.f32.mrf.mxu0
      %v886 = vadd.f32 0.0, %v885
      %v887 = vpop.f32.mrf.mxu0
      %888 = vmatprep.mubr.bf16.mxu0 0
      %889 = vmatmul.mubr.bf16.gmra.mxu0 %v635
      %v890 = vpop.f32.mrf.mxu0
      %v891 = vadd.f32 0.0, %v890
      %v892 = vpop.f32.mrf.mxu0
      %v893 = vpop.f32.mrf.mxu0
      %v894 = vadd.f32 0.0, %v893
      %v895 = vpop.f32.mrf.mxu0
      %896 = vmatprep.mubr.bf16.mxu0 0
      %897 = vmatmul.mubr.bf16.gmra.mxu0 %v638
      %v898 = vpop.f32.mrf.mxu0
      %v899 = vadd.f32 0.0, %v898
      %v900 = vpop.f32.mrf.mxu0
      %v901 = vpop.f32.mrf.mxu0
      %v902 = vadd.f32 0.0, %v901
      %v903 = vpop.f32.mrf.mxu0
      %904 = vmatprep.mubr.bf16.mxu0 0
      %905 = vmatmul.mubr.bf16.gmra.mxu0 %v641
      %v906 = vpop.f32.mrf.mxu0
      %v907 = vadd.f32 0.0, %v906
      %v908 = vpop.f32.mrf.mxu0
      %v909 = vpop.f32.mrf.mxu0
      %v910 = vadd.f32 0.0, %v909
      %v911 = vpop.f32.mrf.mxu0
      %912 = vdwg.mxu0
      %v913 = vadd.f32 %v883, %v841
      %v914 = vadd.f32 %v886, %v844
      %v915 = vadd.f32 %v891, %v841
      %v916 = vadd.f32 %v894, %v844
      %v917 = vadd.f32 %v899, %v841
      %v918 = vadd.f32 %v902, %v844
      %v919 = vadd.f32 %v907, %v841
      %v920 = vadd.f32 %v910, %v844
      %v921 = vmax.f32 %v913, 0.0
      %v922 = vmax.f32 %v914, 0.0
      %v923 = vmax.f32 %v915, 0.0
      %v924 = vmax.f32 %v916, 0.0
      %v925 = vmax.f32 %v917, 0.0
      %v926 = vmax.f32 %v918, 0.0
      %v927 = vmax.f32 %v919, 0.0
      %v928 = vmax.f32 %v920, 0.0
      %vm929 = vcmask 261120
      %v930 = vsel %vm929, %v921, -inf
      %v931 = vsel %vm929, %v923, -inf
      %v932 = vsel %vm929, %v925, -inf
      %v933 = vmax.f32 %v930, %v932
      %v934 = vsel %vm929, %v927, -inf
      %v935 = vmax.f32 %v931, %v934
      %v936 = vmax.f32 %v933, %v935
      %v937 = vsel %vm929, %v922, -inf
      %v938 = vsel %vm929, %v924, -inf
      %v939 = vsel %vm929, %v926, -inf
      %v940 = vmax.f32 %v937, %v939
      %v941 = vsel %vm929, %v928, -inf
      %v942 = vmax.f32 %v938, %v941
      %v943 = vmax.f32 %v940, %v942
      %v944 = vsel %vm929, %v936, -inf
      %v945 = vsel %vm929, %v943, -inf
      %v946 = vmax.f32 %v944, %v945
      %v947 = vrot.slane %v946, 4
      %v948 = vmax.f32 %v946, %v947
      %v949 = vrot.slane %v948, 2
      %v950 = vmax.f32 %v948, %v949
      %v951 = vrot.slane %v950, 1
      %v952 = vmax.f32 %v950, %v951
      %v953 = vpack.c.bf16 %v943, %v936
      %v954 = vld [vmem:[%s8] sm:$0xf]
      %v955 = vld [vmem:[%s8 + $0x4] sm:$0xf]
      %v956 = vld [vmem:[%s8 + $0x8] sm:$0xf]
      %v957 = vld [vmem:[%s8 + $0xc] sm:$0xf]
      %v962 = vunpack.c.l.b16 %v954
      %v963 = vunpack.c.l.b16 %v955
      %v964 = vunpack.c.l.b16 %v956
      %v965 = vunpack.c.l.b16 %v957
      %v966 = vpack.c.b16 %v963, %v962
      %v967 = vpack.c.b16 %v965, %v964
      %v971 = vsel %vm929, %v953, 0
      %973 = vmatprep.subr.bf16.mxu0 0
      %974 = vmatpush1.bf16.msra.mxu0 0
      %975 = vmatprep.subr.bf16.mxu0 0
      %976 = vmatpush1.bf16.msra.mxu0 0
      %977 = vmatprep.subr.bf16.mxu0 0
      %978 = vmatpush1.bf16.msra.mxu0 0
      %979 = vmatprep.subr.bf16.mxu0 0
      %980 = vmatpush1.bf16.msra.mxu0 0
      %981 = vmatprep.subr.bf16.mxu0 0
      %982 = vmatpush1.bf16.msra.mxu0 0
      %983 = vmatprep.subr.bf16.mxu0 0
      %984 = vmatpush1.bf16.msra.mxu0 0
      %985 = vmatprep.subr.bf16.mxu0 0
      %986 = vmatpush1.bf16.msra.mxu0 %v967
      %987 = vmatprep.subr.bf16.mxu0 0
      %988 = vmatpush1.bf16.msra.mxu0 %v966
      %989 = vmatprep.subr.bf16.mxu0 0
      %990 = vmatpush2.bf16.msra.mxu0 0
      %991 = vmatprep.subr.bf16.mxu0 0
      %992 = vmatpush2.bf16.msra.mxu0 0
      %993 = vmatprep.subr.bf16.mxu0 0
      %994 = vmatpush2.bf16.msra.mxu0 0
      %995 = vmatprep.subr.bf16.mxu0 0
      %996 = vmatpush2.bf16.msra.mxu0 0
      %997 = vmatprep.subr.bf16.mxu0 0
      %998 = vmatpush2.bf16.msra.mxu0 0
      %999 = vmatprep.subr.bf16.mxu0 0
      %1000 = vmatpush2.bf16.msra.mxu0 0
      %1001 = vmatprep.subr.bf16.mxu0 0
      %1002 = vmatpush2.bf16.msra.mxu0 0
      %1003 = vmatprep.subr.bf16.mxu0 0
      %1004 = vmatpush2.bf16.msra.mxu0 0
      %1005 = vmatprep.mubr.bf16.mxu0 0
      %1006 = vmatmul.mubr.bf16.gmra.mxu0 %v971
      %v1007 = vpop.f32.mrf.mxu0
      %v1008 = vadd.f32 0.0, %v1007
      %v1009 = vpop.f32.mrf.mxu0
      %v1010 = vpop.f32.mrf.mxu0
      %v1011 = vadd.f32 0.0, %v1010
      %v1012 = vpop.f32.mrf.mxu0
      %1013 = vdwg.mxu0
      %v1014 = vpack.c.bf16 %v952, %v952
      %v1015 = vld [vmem:[%s9] sm:$0xf]
      %v1016 = vld [vmem:[%s9 + $0x4] sm:$0xf]
      %v1017 = vld [vmem:[%s9 + $0x8] sm:$0xf]
      %v1018 = vld [vmem:[%s9 + $0xc] sm:$0xf]
      %v1023 = vunpack.c.l.b16 %v1015
      %v1024 = vunpack.c.l.b16 %v1016
      %v1025 = vunpack.c.l.b16 %v1017
      %v1026 = vunpack.c.l.b16 %v1018
      %v1027 = vpack.c.b16 %v1024, %v1023
      %v1028 = vpack.c.b16 %v1026, %v1025
      %v1032 = vsel %vm929, %v1014, 0
      %1034 = vmatprep.subr.bf16.mxu0 0
      %1035 = vmatpush1.bf16.msra.mxu0 0
      %1036 = vmatprep.subr.bf16.mxu0 0
      %1037 = vmatpush1.bf16.msra.mxu0 0
      %1038 = vmatprep.subr.bf16.mxu0 0
      %1039 = vmatpush1.bf16.msra.mxu0 0
      %1040 = vmatprep.subr.bf16.mxu0 0
      %1041 = vmatpush1.bf16.msra.mxu0 0
      %1042 = vmatprep.subr.bf16.mxu0 0
      %1043 = vmatpush1.bf16.msra.mxu0 0
      %1044 = vmatprep.subr.bf16.mxu0 0
      %1045 = vmatpush1.bf16.msra.mxu0 0
      %1046 = vmatprep.subr.bf16.mxu0 0
      %1047 = vmatpush1.bf16.msra.mxu0 %v1028
      %1048 = vmatprep.subr.bf16.mxu0 0
      %1049 = vmatpush1.bf16.msra.mxu0 %v1027
      %1050 = vmatprep.subr.bf16.mxu0 0
      %1051 = vmatpush2.bf16.msra.mxu0 0
      %1052 = vmatprep.subr.bf16.mxu0 0
      %1053 = vmatpush2.bf16.msra.mxu0 0
      %1054 = vmatprep.subr.bf16.mxu0 0
      %1055 = vmatpush2.bf16.msra.mxu0 0
      %1056 = vmatprep.subr.bf16.mxu0 0
      %1057 = vmatpush2.bf16.msra.mxu0 0
      %1058 = vmatprep.subr.bf16.mxu0 0
      %1059 = vmatpush2.bf16.msra.mxu0 0
      %1060 = vmatprep.subr.bf16.mxu0 0
      %1061 = vmatpush2.bf16.msra.mxu0 0
      %1062 = vmatprep.subr.bf16.mxu0 0
      %1063 = vmatpush2.bf16.msra.mxu0 0
      %1064 = vmatprep.subr.bf16.mxu0 0
      %1065 = vmatpush2.bf16.msra.mxu0 0
      %1066 = vmatprep.mubr.bf16.mxu0 0
      %1067 = vmatmul.mubr.bf16.gmra.mxu0 %v1032
      %v1068 = vpop.f32.mrf.mxu0
      %v1069 = vadd.f32 0.0, %v1068
      %v1070 = vpop.f32.mrf.mxu0
      %v1071 = vpop.f32.mrf.mxu0
      %v1072 = vpop.f32.mrf.mxu0
      %1073 = vdwg.mxu0
      %v1074 = vlaneseq
      %v1075 = vshrl.u32 %v1074, 7
      %v1076 = vsub.s32 0, %v1075
      %v1077 = vrot.slane %v1069, %v1076
      %v1078 = vadd.f32 %v1008, %v1077
      %v1079 = vadd.f32 %v1011, %v1077
      %v1080 = vld [vmem:[%s10] sm:$0x1]
      %v1082 = vlaneseq
      %v1083 = vshrl.u32 %v1082, 7
      %v1084 = vsub.s32 0, %v1083
      %v1085 = vrot.slane %v1080, %v1084
      %v1087 = vadd.f32 %v1078, %v1085
      %v1088 = vadd.f32 %v1079, %v1085
      %v1089 = vmax.f32 %v1087, 0.0
      %v1090 = vmax.f32 %v1088, 0.0
      %v1091 = vpack.c.bf16 %v1090, %v1089
      %v1092 = vld [vmem:[%s11] sm:$0xf]
      %v1093 = vld [vmem:[%s11 + $0x4] sm:$0xf]
      %v1094 = vld [vmem:[%s11 + $0x8] sm:$0xf]
      %v1095 = vld [vmem:[%s11 + $0xc] sm:$0xf]
      %v1096 = vld [vmem:[%s12] sm:$0x1]
      %v1098 = vlaneseq
      %v1099 = vshrl.u32 %v1098, 7
      %v1100 = vsub.s32 0, %v1099
      %v1101 = vrot.slane %v1096, %v1100
      %v1107 = vunpack.c.l.b16 %v1092
      %v1108 = vunpack.c.l.b16 %v1093
      %v1109 = vunpack.c.l.b16 %v1094
      %v1110 = vunpack.c.l.b16 %v1095
      %v1111 = vpack.c.b16 %v1108, %v1107
      %v1112 = vpack.c.b16 %v1110, %v1109
      %v1116 = vsel %vm929, %v1091, 0
      %1118 = vmatprep.subr.bf16.mxu0 0
      %1119 = vmatpush1.bf16.msra.mxu0 0
      %1120 = vmatprep.subr.bf16.mxu0 0
      %1121 = vmatpush1.bf16.msra.mxu0 0
      %1122 = vmatprep.subr.bf16.mxu0 0
      %1123 = vmatpush1.bf16.msra.mxu0 0
      %1124 = vmatprep.subr.bf16.mxu0 0
      %1125 = vmatpush1.bf16.msra.mxu0 0
      %1126 = vmatprep.subr.bf16.mxu0 0
      %1127 = vmatpush1.bf16.msra.mxu0 0
      %1128 = vmatprep.subr.bf16.mxu0 0
      %1129 = vmatpush1.bf16.msra.mxu0 0
      %1130 = vmatprep.subr.bf16.mxu0 0
      %1131 = vmatpush1.bf16.msra.mxu0 %v1112
      %1132 = vmatprep.subr.bf16.mxu0 0
      %1133 = vmatpush1.bf16.msra.mxu0 %v1111
      %1134 = vmatprep.subr.bf16.mxu0 0
      %1135 = vmatpush2.bf16.msra.mxu0 0
      %1136 = vmatprep.subr.bf16.mxu0 0
      %1137 = vmatpush2.bf16.msra.mxu0 0
      %1138 = vmatprep.subr.bf16.mxu0 0
      %1139 = vmatpush2.bf16.msra.mxu0 0
      %1140 = vmatprep.subr.bf16.mxu0 0
      %1141 = vmatpush2.bf16.msra.mxu0 0
      %1142 = vmatprep.subr.bf16.mxu0 0
      %1143 = vmatpush2.bf16.msra.mxu0 0
      %1144 = vmatprep.subr.bf16.mxu0 0
      %1145 = vmatpush2.bf16.msra.mxu0 0
      %1146 = vmatprep.subr.bf16.mxu0 0
      %1147 = vmatpush2.bf16.msra.mxu0 0
      %1148 = vmatprep.subr.bf16.mxu0 0
      %1149 = vmatpush2.bf16.msra.mxu0 0
      %1150 = vmatprep.mubr.bf16.mxu0 0
      %1151 = vmatmul.mubr.bf16.gmra.mxu0 %v1116
      %v1152 = vpop.f32.mrf.mxu0
      %v1153 = vadd.f32 %v1101, %v1152
      %v1154 = vpop.f32.mrf.mxu0
      %v1155 = vpop.f32.mrf.mxu0
      %v1156 = vadd.f32 %v1101, %v1155
      %v1157 = vpop.f32.mrf.mxu0
      %1158 = vdwg.mxu0
      %v1159 = vtanh.pop %v1153
      %v1160 = vtanh.pop %v1156
      %v1161 = vmul.f32 %v1159, 10.0
      %v1162 = vmul.f32 %v1160, 10.0
      %vm1163 = vcmp.lt.s32.totalorder %v473, 3
      %v1164 = vsel %vm1163, %v1161, -1e+30
      %v1165 = vsel %vm1163, %v1162, -1e+30
      %1166 = vmax.xlane.f32.xlu0 %v1164
      %v1167 = vpop.xlane.xlu0 %1166
      %1168 = vmax.xlane.f32.xlu0 %v1165
      %v1169 = vpop.xlane.xlu0 %1168
      %v1170 = vsub.f32 %v1164, %v1167
      %v1171 = vsub.f32 %v1165, %v1169
      %v1172 = vmul.f32 %v1170, 1.442695
      %v1173 = vpow.pop %v1172
      %v1174 = vmul.f32 %v1171, 1.442695
      %v1175 = vpow.pop %v1174
      %1176 = vadd.xlane.f32.xlu0 %v1173
      %v1177 = vpop.xlane.xlu0 %1176
      %1178 = vadd.xlane.f32.xlu0 %v1175
      %v1179 = vpop.xlane.xlu0 %1178
      %v1180 = vrcp.pop %v1177
      %v1181 = vmul.f32 %v1173, %v1180
      %v1182 = vrcp.pop %v1179
      %v1183 = vmul.f32 %v1175, %v1182
      %1184 = vst [vmem:[%s460] sm:$0xff] %v1181
      %1185 = vst [vmem:[%s460 + $0x8] sm:$0xff] %v1183
      %p1186 = scmp.lt.s32.totalorder %s24, 1
      %s1187 = scalar_select %p1186, %s24, 1
      %s1188 = smul.addr %s1187, 2
      %s1189 = smul.addr %s1188, 8
      %s1190 = scalar_lea.vmem %s13, %s1189
      // Predicated region
      $region73: #{mtsp_forward.1} parent=71 // pred_check
        %p1191 = pneg %p325
      $region74: #{mtsp_forward.1} parent=71 // pred_check_branch
        %1193 = sbr.rel (%p1191) target = $region76
      $region75: #{mtsp_forward.1} parent=71 // pred_region
        _
      $region76: #{mtsp_forward.1} parent=71 // pred_fallthru
        _
    $region72: #{mtsp_forward.1} parent=5 // pred_fallthru
      _
    %p1194 = scmp.le.s32.totalorder 2, %s19
    // Predicated region
    $region77: #{mtsp_forward.1} parent=5 // pred_check
      %p1195 = pneg %p1194
    $region78: #{mtsp_forward.1} parent=5 // pred_check_branch
      %1197 = sbr.rel (%p1195) target = $region80
    $region79: #{mtsp_forward.1} parent=5 // pred_region
      %s1198 = ssub.s32 %s19, 2
      // Predicated region
      $region81: #{mtsp_forward.1} parent=79 // pred_check
        %p1199 = pneg %p331
      $region82: #{mtsp_forward.1} parent=79 // pred_check_branch
        %1201 = sbr.rel (%p1199) target = $region84
      $region83: #{mtsp_forward.1} parent=79 // pred_region
        %p1202 = scmp.lt.s32.totalorder %s25, 1
        %s1203 = scalar_select %p1202, %s25, 1
        %s1204 = smul.addr %s1203, 2
        %s1205 = smul.addr %s1204, 8
        %s1206 = scalar_lea.vmem %s13, %s1205
      $region84: #{mtsp_forward.1} parent=79 // pred_fallthru
        _
    $region80: #{mtsp_forward.1} parent=5 // pred_fallthru
      _
  $region6: #{mtsp_forward.1} parent=0 // loop_footer
    %s23 = sadd.s32 1, %s19
  $region7: #{mtsp_forward.1} parent=0 // loop_footer_branch
    %18 = sbr.rel target = $region3
  $region8: #{mtsp_forward.1} parent=0 // loop_exit
    _

</llo_original>
